<compile_context>
chip_gen: v5e
topology: v5e:2x2
jax: 0.10.0
libtpu: 0.0.40
codegen_flags: <defaults>
</compile_context>

<pallas_src>
import functools
import math

import jax
import jax.numpy as jnp
from jax import lax
from jax.experimental import pallas as pl
from jax.experimental.pallas import tpu as pltpu


_LANE_CHUNK = 512          # inner compute chunk (lanes); also the tile grain
_MAX_TILE_COLS = 131072    # absolute cap on the batch-tile width (columns)


def _round_up(n, m):
    return ((n + m - 1) // m) * m


def _cdiv(a, b):
    return (a + b - 1) // b


def _tile_cap_columns():
    """Generation-aware cap on batch-tile width (columns).

    Pipelined VMEM cost of this kernel is ~128 B / batch column (f32 in + out,
    2->8 sublane padding, double-buffered), so budget ~1/8 of physical VMEM:
    v5e/v6e (128 MiB) -> 128K columns, v7x (64 MiB) -> 64K columns.
    """
    vmem_bytes = 64 << 20                       # conservative (v7x) fallback
    try:
        info_fn = getattr(pltpu, "get_tpu_info", None)
        if info_fn is not None:
            vmem_bytes = int(getattr(info_fn(), "vmem_capacity_bytes", vmem_bytes))
    except Exception:
        pass
    cap = (vmem_bytes // 8) // 128
    cap = (cap // _LANE_CHUNK) * _LANE_CHUNK
    return int(max(_LANE_CHUNK, min(_MAX_TILE_COLS, cap)))


def projector_kernel(xT_ref, w1_ref, b1_ref, w2_ref, b2_ref, yT_ref, *, chunk):
    """One batch tile of y = W2 @ relu(W1 @ x + b1) + b2, batch on the lane axis.

    xT_ref : (d_in, TB)   input tile (batch on lanes)
    w1_ref : (H, d_in)    layer-1 weight (PyTorch out x in layout)
    b1_ref : (H, 1)       layer-1 bias (column)
    w2_ref : (d_out, H)   layer-2 weight (PyTorch out x in layout)
    b2_ref : (d_out, 1)   layer-2 bias (column)
    yT_ref : (d_out, TB)  output tile (batch on lanes)
    """
    tb = xT_ref.shape[1]
    h_dim = w1_ref.shape[0]
    d_out = w2_ref.shape[0]
    n_chunks = tb // chunk
    hi = jax.lax.Precision.HIGHEST

    # Hoist weight loads and bias broadcasts out of the chunk loop
    # (JAX does not CSE broadcast_in_dim across iterations).
    w1 = w1_ref[...]                                       # (H, d_in)  f32
    w2 = w2_ref[...]                                       # (d_out, H) f32
    b1 = jnp.broadcast_to(b1_ref[...], (h_dim, chunk))     # (H, CH)
    b2 = jnp.broadcast_to(b2_ref[...], (d_out, chunk))     # (d_out, CH)

    def body(c, carry):
        start = pl.multiple_of(c * chunk, chunk)
        x = xT_ref[:, pl.ds(start, chunk)].astype(jnp.float32)       # (d_in, CH)
        # Both MACs on the otherwise-idle MXU; HIGHEST keeps f32 accuracy.
        h = jnp.maximum(
            lax.dot(w1, x, precision=hi, preferred_element_type=jnp.float32) + b1,
            0.0)                                                      # (H, CH)
        y = lax.dot(w2, h, precision=hi, preferred_element_type=jnp.float32) + b2
        # Single full-width store per chunk (all d_out rows at once).
        yT_ref[:, pl.ds(start, chunk)] = y.astype(yT_ref.dtype)
        return carry

    lax.fori_loop(0, n_chunks, body, 0)


def projector_forward_t(xT, w1, b1, w2, b2, *, tile_cols=None):
    """Transposed entry point: xT is (d_in, B); returns (d_out, B).

    Producers/consumers that can keep the (feature, batch) layout should call
    this directly — it avoids the x.T / y.T wrapper HBM passes entirely.
    """
    d_in, B = xT.shape
    H = w1.shape[0]
    d_out = w2.shape[0]
    out_dtype = xT.dtype

    cap = tile_cols if tile_cols is not None else _tile_cap_columns()
    cap = max(_LANE_CHUNK, (int(cap) // _LANE_CHUNK) * _LANE_CHUNK)

    # Balanced batch tiles: pad only to the tile grain (<= n_tiles*512 junk
    # columns, not to a multiple of a huge fixed TB).  Use >= 2 (even count)
    # tiles whenever possible so megacore sharding (v7x) can engage.
    b128 = _round_up(max(B, 1), 128)
    n_tiles = _cdiv(b128, cap)
    if b128 > _LANE_CHUNK:
        n_tiles = max(n_tiles, 2)
        n_tiles += n_tiles % 2
    tb = _round_up(_cdiv(b128, n_tiles), _LANE_CHUNK)
    b_pad = n_tiles * tb

    if b_pad != B:
        xT = jnp.pad(xT, ((0, 0), (0, b_pad - B)))

    w1f = w1.astype(jnp.float32).reshape(H, d_in)
    b1c = b1.astype(jnp.float32).reshape(H, 1)
    w2f = w2.astype(jnp.float32).reshape(d_out, H)
    b2c = b2.astype(jnp.float32).reshape(d_out, 1)

    itemsize = jnp.dtype(out_dtype).itemsize
    cost = pl.CostEstimate(
        flops=2 * b_pad * (d_in * H + H * d_out),
        transcendentals=0,
        bytes_accessed=(xT.size * xT.dtype.itemsize
                        + b_pad * d_out * itemsize
                        + 4 * (w1f.size + b1c.size + w2f.size + b2c.size)),
    )

    # Double-buffered x & y blocks: ~128 B / column (2->8 sublane pad, f32).
    pipeline_vmem = 128 * tb
    vmem_limit = int(min(48 << 20, max(32 << 20, pipeline_vmem + (8 << 20))))

    grid_spec = pltpu.PrefetchScalarGridSpec(
        num_scalar_prefetch=0,
        grid=(n_tiles,),
        in_specs=[
            pl.BlockSpec((d_in, tb), lambda i: (0, i)),    # x^T : batch-tiled
            pl.BlockSpec((H, d_in), lambda i: (0, 0)),     # W1  : VMEM-resident
            pl.BlockSpec((H, 1), lambda i: (0, 0)),        # b1
            pl.BlockSpec((d_out, H), lambda i: (0, 0)),    # W2
            pl.BlockSpec((d_out, 1), lambda i: (0, 0)),    # b2
        ],
        out_specs=pl.BlockSpec((d_out, tb), lambda i: (0, i)),
    )

    yT = pl.pallas_call(
        functools.partial(projector_kernel, chunk=_LANE_CHUNK),
        out_shape=jax.ShapeDtypeStruct((d_out, b_pad), out_dtype),
        grid_spec=grid_spec,
        compiler_params=pltpu.CompilerParams(
            dimension_semantics=("parallel",),   # shard batch tiles across TCs
            vmem_limit_bytes=vmem_limit,
        ),
        cost_estimate=cost,
    )(xT, w1f, b1c, w2f, b2c)

    return yT[:, :B]


def projector_forward(x, w1, b1, w2, b2, *, tile_cols=None):
    """PyTorch-compatible interface: x (B, d_in) -> (B, d_out).

    The two transposes here are pure layout plumbing (one HBM pass each);
    callers that can keep (feature, batch) layout should use
    `projector_forward_t` instead and skip them.
    """
    yT = projector_forward_t(x.T, w1, b1, w2, b2, tile_cols=tile_cols)
    return yT.T


def init_params(key, hidden_dim=2, proj_dim=30):
    """Deterministic init mimicking nn.Linear (uniform +/- 1/sqrt(fan_in)),
    stored in PyTorch layout (out_features, in_features)."""
    k1, k2, k3, k4 = jax.random.split(key, 4)
    bound1 = 1.0 / math.sqrt(hidden_dim)
    bound2 = 1.0 / math.sqrt(proj_dim)
    w1 = jax.random.uniform(k1, (proj_dim, hidden_dim), jnp.float32, -bound1, bound1)
    b1 = jax.random.uniform(k2, (proj_dim,), jnp.float32, -bound1, bound1)
    w2 = jax.random.uniform(k3, (hidden_dim, proj_dim), jnp.float32, -bound2, bound2)
    b2 = jax.random.uniform(k4, (hidden_dim,), jnp.float32, -bound2, bound2)
    return w1, b1, w2, b2


if __name__ == "__main__":
    key = jax.random.PRNGKey(0)
    kx1, kx2, kp = jax.random.split(key, 3)

    HIDDEN_DIM, PROJ_DIM = 2, 30             # defaults: hidden_dim=2, Lvpj[0]=30
    w1, b1, w2, b2 = init_params(kp, HIDDEN_DIM, PROJ_DIM)

    def ref_forward(x):
        hi = jax.lax.Precision.HIGHEST
        h = jnp.maximum(jnp.dot(x, w1.T, precision=hi) + b1, 0.0)
        return jnp.dot(h, w2.T, precision=hi) + b2

    # Small batch: single tile (8 rows padded to one 512-column tile).
    B1 = 8
    x1 = jax.random.normal(kx1, (B1, HIDDEN_DIM), jnp.float32)
    out1 = jax.block_until_ready(projector_forward(x1, w1, b1, w2, b2))
    assert out1.shape == (B1, HIDDEN_DIM)
    assert jnp.allclose(out1, ref_forward(x1), atol=1e-4, rtol=1e-4), "mismatch (B=8)"

    # Larger batch: exercises >= 2 parallel tiles + minimal tail padding.
    B2 = 3000
    x2 = jax.random.normal(kx2, (B2, HIDDEN_DIM), jnp.float32)
    out2 = jax.block_until_ready(projector_forward(x2, w1, b1, w2, b2))
    assert out2.shape == (B2, HIDDEN_DIM)
    assert jnp.allclose(out2, ref_forward(x2), atol=1e-4, rtol=1e-4), "mismatch (B=3000)"

    # Transposed (feature, batch) entry point — skips the wrapper .T passes.
    out2_t = jax.block_until_ready(projector_forward_t(x2.T, w1, b1, w2, b2))
    assert out2_t.shape == (HIDDEN_DIM, B2)
    assert jnp.allclose(out2_t.T, ref_forward(x2), atol=1e-4, rtol=1e-4), "mismatch (T)"

    print("KERNEL_OK")
</pallas_src>

<mosaic_0001>
module attributes {stable_mosaic.version = 11 : i64} {
  func.func @projector_kernel(%arg0: i32, %arg1: memref<2x512xf32, #tpu.memory_space<vmem>>, %arg2: memref<30x2xf32, #tpu.memory_space<vmem>>, %arg3: memref<30x1xf32, #tpu.memory_space<vmem>>, %arg4: memref<2x30xf32, #tpu.memory_space<vmem>>, %arg5: memref<2x1xf32, #tpu.memory_space<vmem>>, %arg6: memref<2x512xf32, #tpu.memory_space<vmem>>) attributes {dimension_semantics = [#tpu.dimension_semantics<parallel>], iteration_bounds = array<i64: 1>, scalar_prefetch = 0 : i64, scratch_operands = 0 : i64, tpu.core_type = #tpu.core_type<tc>, window_params = [{transform_indices = @transform_0, window_bounds = array<i64: 2, 512>}, {pipeline_mode = #tpu.pipeline_mode<synchronous>, transform_indices = @transform_1, window_bounds = array<i64: 30, 2>}, {pipeline_mode = #tpu.pipeline_mode<synchronous>, transform_indices = @transform_2, window_bounds = array<i64: 30, 1>}, {pipeline_mode = #tpu.pipeline_mode<synchronous>, transform_indices = @transform_3, window_bounds = array<i64: 2, 30>}, {pipeline_mode = #tpu.pipeline_mode<synchronous>, transform_indices = @transform_4, window_bounds = array<i64: 2, 1>}, {transform_indices = @transform_5, window_bounds = array<i64: 2, 512>}]} {
    %c0 = arith.constant 0 : index
    %c0_0 = arith.constant 0 : index
    %0 = vector.load %arg2[%c0, %c0_0] : memref<30x2xf32, #tpu.memory_space<vmem>>, vector<30x2xf32>
    %c0_1 = arith.constant 0 : index
    %c0_2 = arith.constant 0 : index
    %1 = vector.load %arg4[%c0_1, %c0_2] : memref<2x30xf32, #tpu.memory_space<vmem>>, vector<2x30xf32>
    %c0_3 = arith.constant 0 : index
    %c0_4 = arith.constant 0 : index
    %2 = vector.load %arg3[%c0_3, %c0_4] : memref<30x1xf32, #tpu.memory_space<vmem>>, vector<30x1xf32>
    %3 = vector.shape_cast %2 : vector<30x1xf32> to vector<30x1xf32>
    %4 = vector.broadcast %3 : vector<30x1xf32> to vector<30x512xf32>
    %c0_5 = arith.constant 0 : index
    %c0_6 = arith.constant 0 : index
    %5 = vector.load %arg5[%c0_5, %c0_6] : memref<2x1xf32, #tpu.memory_space<vmem>>, vector<2x1xf32>
    %6 = vector.shape_cast %5 : vector<2x1xf32> to vector<2x1xf32>
    %7 = vector.broadcast %6 : vector<2x1xf32> to vector<2x512xf32>
    %c0_i32 = arith.constant 0 : i32
    %c512_i32 = arith.constant 512 : i32
    %8 = arith.muli %c0_i32, %c512_i32 : i32
    %9 = tpu.assume_multiple %8, 512 : i32
    %c0_7 = arith.constant 0 : index
    %10 = arith.index_cast %9 : i32 to index
    %11 = vector.load %arg1[%c0_7, %10] : memref<2x512xf32, #tpu.memory_space<vmem>>, vector<2x512xf32>
    %cst = arith.constant dense<0.000000e+00> : vector<30x512xf32>
    %12 = tpu.matmul %0, %11, %cst {dimension_numbers = #tpu.dot_dimension_numbers<[1], [0], [0], [1], [0, 0, 1, 1], [], []>, precision = #tpu.contract_precision<fp32>} : vector<30x2xf32>, vector<2x512xf32>, vector<30x512xf32> -> vector<30x512xf32>
    %13 = arith.addf %12, %4 : vector<30x512xf32>
    %cst_8 = arith.constant 0.000000e+00 : f32
    %14 = vector.broadcast %cst_8 : f32 to vector<30x512xf32>
    %15 = arith.maximumf %13, %14 : vector<30x512xf32>
    %cst_9 = arith.constant dense<0.000000e+00> : vector<2x512xf32>
    %16 = tpu.matmul %1, %15, %cst_9 {dimension_numbers = #tpu.dot_dimension_numbers<[1], [0], [0], [1], [0, 0, 1, 1], [], []>, precision = #tpu.contract_precision<fp32>} : vector<2x30xf32>, vector<30x512xf32>, vector<2x512xf32> -> vector<2x512xf32>
    %17 = arith.addf %16, %7 : vector<2x512xf32>
    %c0_10 = arith.constant 0 : index
    %18 = arith.index_cast %9 : i32 to index
    %19 = vector.load %arg6[%c0_10, %18] : memref<2x512xf32, #tpu.memory_space<vmem>>, vector<2x512xf32>
    tpu.vector_store %arg6[%c0_10, %18], %17 {strides = array<i32>} : memref<2x512xf32, #tpu.memory_space<vmem>>, vector<2x512xf32>,
    %c1_i32 = arith.constant 1 : i32
    return
  }
  func.func @transform_0(%arg0: i32) -> (i32, i32) {
    %c0_i32 = arith.constant 0 : i32
    %c0_i32_0 = arith.constant 0 : i32
    return %c0_i32, %arg0 : i32, i32
  }
  func.func @transform_1(%arg0: i32) -> (i32, i32) {
    %c0_i32 = arith.constant 0 : i32
    %c0_i32_0 = arith.constant 0 : i32
    %c0_i32_1 = arith.constant 0 : i32
    return %c0_i32, %c0_i32_0 : i32, i32
  }
  func.func @transform_2(%arg0: i32) -> (i32, i32) {
    %c0_i32 = arith.constant 0 : i32
    %c0_i32_0 = arith.constant 0 : i32
    %c0_i32_1 = arith.constant 0 : i32
    return %c0_i32, %c0_i32_0 : i32, i32
  }
  func.func @transform_3(%arg0: i32) -> (i32, i32) {
    %c0_i32 = arith.constant 0 : i32
    %c0_i32_0 = arith.constant 0 : i32
    %c0_i32_1 = arith.constant 0 : i32
    return %c0_i32, %c0_i32_0 : i32, i32
  }
  func.func @transform_4(%arg0: i32) -> (i32, i32) {
    %c0_i32 = arith.constant 0 : i32
    %c0_i32_0 = arith.constant 0 : i32
    %c0_i32_1 = arith.constant 0 : i32
    return %c0_i32, %c0_i32_0 : i32, i32
  }
  func.func @transform_5(%arg0: i32) -> (i32, i32) {
    %c0_i32 = arith.constant 0 : i32
    %c0_i32_0 = arith.constant 0 : i32
    return %c0_i32, %arg0 : i32, i32
  }
}

</mosaic_0001>

<llo_original>
// kernel: tpu_custom_call.1
$region0: #{tpu_custom_call.1}
  #allocation0 [shape = 'u32[]', space=smem, size = 0x4, offset = 0x4, fixed_abs, tag = 'smem constant byte address 0x4 - core index']
  #allocation1 [shape = 'u32[72,128]{1,0:T(1,128)}', space=vmem, size = 0x9000, scoped, tag = 'internal scratch']
  %s0 = inlined_call_operand.vmem [shape: f32[2,512], index: 0, kind: input, shape index: {}]
  %s1 = inlined_call_operand.vmem [shape: f32[30,2], index: 1, kind: input, shape index: {}]
  %s2 = inlined_call_operand.vmem [shape: f32[30,1], index: 2, kind: input, shape index: {}]
  %s3 = inlined_call_operand.vmem [shape: f32[2,30], index: 3, kind: input, shape index: {}]
  %s4 = inlined_call_operand.vmem [shape: f32[2,1], index: 4, kind: input, shape index: {}]
  %s5 = inlined_call_operand.hbm [shape: f32[2,512], index: 5, kind: output, shape index: {}]
  %s6 = sld [smem:[#allocation0]]
  $region30: #{tpu_custom_call.1} parent=0
    _
  %s8 = ssub.s32 1, %s6
  %s9 = scalar_select 0, %s8, %s6
  $region1: #{tpu_custom_call.1} parent=0
    #allocation2 [shape = 'u8[4096]{0}', space=vmem, size = 0x1000, scoped, tag = 'output window, operand 0, single buffered']
    #allocation3 [shape = 's32[1]{0}', space=sflag, size = 0x4, scoped, tag = 'scoped memory for tpu_custom_call.1']
    %10 = vsyncpa [#allocation3], 0
    // Predicated region
    $region2: #{tpu_custom_call.1} parent=1 // pred_check
      _
    $region3: #{tpu_custom_call.1} parent=1 // pred_check_branch
      %12 = sbr.rel (0) target = $region5
    $region4: #{tpu_custom_call.1} parent=1 // pred_region
      _
    $region5: #{tpu_custom_call.1} parent=1 // pred_fallthru
      _
    // Predicated region
    $region6: #{tpu_custom_call.1} parent=1 // pred_check
      _
    $region7: #{tpu_custom_call.1} parent=1 // pred_check_branch
      %14 = sbr.rel (0) target = $region9
    $region8: #{tpu_custom_call.1} parent=1 // pred_region
      _
    $region9: #{tpu_custom_call.1} parent=1 // pred_fallthru
      _
    // Predicated region
    $region10: #{tpu_custom_call.1} parent=1 // pred_check
      _
    $region11: #{tpu_custom_call.1} parent=1 // pred_check_branch
      %16 = sbr.rel (0) target = $region13
    $region12: #{tpu_custom_call.1} parent=1 // pred_region
      _
    $region13: #{tpu_custom_call.1} parent=1 // pred_fallthru
      _
    // Predicated region
    $region14: #{tpu_custom_call.1} parent=1 // pred_check
      _
    $region15: #{tpu_custom_call.1} parent=1 // pred_check_branch
      %18 = sbr.rel (0) target = $region17
    $region16: #{tpu_custom_call.1} parent=1 // pred_region
      _
    $region17: #{tpu_custom_call.1} parent=1 // pred_fallthru
      _
    // Predicated region
    $region18: #{tpu_custom_call.1} parent=1 // pred_check
      _
    $region19: #{tpu_custom_call.1} parent=1 // pred_check_branch
      %20 = sbr.rel (0) target = $region21
    $region20: #{tpu_custom_call.1} parent=1 // pred_region
      _
    $region21: #{tpu_custom_call.1} parent=1 // pred_fallthru
      _
    %v21 = vld [vmem:[%s1] sm:$0xff]
    %v22 = vld [vmem:[%s1 + $0x8] sm:$0xff]
    %v23 = vld [vmem:[%s1 + $0x10] sm:$0xff]
    %v24 = vld [vmem:[%s1 + $0x18] sm:$0x3f]
    %v25 = vld [vmem:[%s3] sm:$0x3]
    %v26 = vld [vmem:[%s2] sm:$0xff]
    %v27 = vld [vmem:[%s2 + $0x8] sm:$0xff]
    %v28 = vld [vmem:[%s2 + $0x10] sm:$0xff]
    %v29 = vld [vmem:[%s2 + $0x18] sm:$0x3f]
    %31 = vset.pattern.permute.xlu0 0
    %32 = vperm.xlu0 %31, %v26
    %v33 = vpop.permute.xlu0 %32
    %36 = vset.pattern.permute.xlu0 0
    %37 = vperm.xlu0 %36, %v27
    %v38 = vpop.permute.xlu0 %37
    %41 = vset.pattern.permute.xlu0 0
    %42 = vperm.xlu0 %41, %v28
    %v43 = vpop.permute.xlu0 %42
    %46 = vset.pattern.permute.xlu0 0
    %47 = vperm.xlu0 %46, %v29
    %v48 = vpop.permute.xlu0 %47
    %v50 = vld [vmem:[%s4] sm:$0x3]
    %52 = vset.pattern.permute.xlu0 0
    %53 = vperm.xlu0 %52, %v50
    %v54 = vpop.permute.xlu0 %53
    %v56 = vld [vmem:[%s0] sm:$0xff]
    %58 = vst [vmem:[#allocation1] ss:$4 sm:$0xff] %v56
    %v59 = vld.sshfl [vmem:[#allocation1] sm:$0xff pattern:$0x73625140]
    %v60 = vld.sshfl [vmem:[#allocation1 + $0x8] sm:$0xff pattern:$0x73625140]
    %v61 = vld.sshfl [vmem:[#allocation1 + $0x10] sm:$0xff pattern:$0x73625140]
    %v62 = vld.sshfl [vmem:[#allocation1 + $0x18] sm:$0xff pattern:$0x73625140]
    %vm63 = vcmask 15360
    %v65 = vsel %vm63, %v21, 0
    %v68 = vsel %vm63, %v22, 0
    %v71 = vsel %vm63, %v23, 0
    %v74 = vsel %vm63, %v24, 0
    %vm76 = vcmask 1041408
    %v77 = vsel %vm76, %v59, 0
    %v79 = vsel %vm76, %v60, 0
    %v81 = vsel %vm76, %v61, 0
    %v83 = vsel %vm76, %v62, 0
    %85 = vmatpush.msra.mxu0 0.0
    %86 = vmatpush.msra.mxu0 0.0
    %87 = vmatpush.msra.mxu0 0.0
    %88 = vmatpush.msra.mxu0 0.0
    %89 = vmatpush.msra.mxu0 0.0
    %90 = vmatpush.msra.mxu0 0.0
    %91 = vmatpush.msra.mxu0 0.0
    %92 = vmatpush.msra.mxu0 0.0
    %93 = vmatpush.msra.mxu0 0.0
    %94 = vmatpush.msra.mxu0 0.0
    %95 = vmatpush.msra.mxu0 0.0
    %96 = vmatpush.msra.mxu0 0.0
    %97 = vmatpush.msra.mxu0 0.0
    %98 = vmatpush.msra.mxu0 0.0
    %99 = vmatpush.msra.mxu0 0.0
    %v100 = vand.u32 %v77, 4294901760
    %101 = vmatpush.msra.mxu0 %v100
    %v102 = vand.u32 %v65, 4294901760
    %v103 = vsub.f32 %v65, %v102
    %v104 = vand.u32 %v103, 4294901760
    %v105 = vsub.f32 %v103, %v104
    %v106 = vand.u32 %v105, 4294901760
    %107 = vmatmul.f32.gmra.mxu0 %v106
    %v108 = vpop.f32.mrf.mxu0
    %v109 = vadd.f32 %v33, %v108
    %v110 = vand.u32 %v68, 4294901760
    %v111 = vsub.f32 %v68, %v110
    %v112 = vand.u32 %v111, 4294901760
    %v113 = vsub.f32 %v111, %v112
    %v114 = vand.u32 %v113, 4294901760
    %115 = vmatmul.f32.gmra.mxu0 %v114
    %v116 = vpop.f32.mrf.mxu0
    %v117 = vadd.f32 %v38, %v116
    %v118 = vand.u32 %v71, 4294901760
    %v119 = vsub.f32 %v71, %v118
    %v120 = vand.u32 %v119, 4294901760
    %v121 = vsub.f32 %v119, %v120
    %v122 = vand.u32 %v121, 4294901760
    %123 = vmatmul.f32.gmra.mxu0 %v122
    %v124 = vpop.f32.mrf.mxu0
    %v125 = vadd.f32 %v43, %v124
    %v126 = vand.u32 %v74, 4294901760
    %v127 = vsub.f32 %v74, %v126
    %v128 = vand.u32 %v127, 4294901760
    %v129 = vsub.f32 %v127, %v128
    %v130 = vand.u32 %v129, 4294901760
    %131 = vmatmul.f32.gmra.mxu0 %v130
    %v132 = vpop.f32.mrf.mxu0
    %v133 = vadd.f32 %v48, %v132
    %134 = vdwg.mxu0
    %135 = vmatpush.msra.mxu0 0.0
    %136 = vmatpush.msra.mxu0 0.0
    %137 = vmatpush.msra.mxu0 0.0
    %138 = vmatpush.msra.mxu0 0.0
    %139 = vmatpush.msra.mxu0 0.0
    %140 = vmatpush.msra.mxu0 0.0
    %141 = vmatpush.msra.mxu0 0.0
    %142 = vmatpush.msra.mxu0 0.0
    %143 = vmatpush.msra.mxu0 0.0
    %144 = vmatpush.msra.mxu0 0.0
    %145 = vmatpush.msra.mxu0 0.0
    %146 = vmatpush.msra.mxu0 0.0
    %147 = vmatpush.msra.mxu0 0.0
    %148 = vmatpush.msra.mxu0 0.0
    %149 = vmatpush.msra.mxu0 0.0
    %v150 = vand.u32 %v77, 4294901760
    %v151 = vsub.f32 %v77, %v150
    %v152 = vand.u32 %v151, 4294901760
    %v153 = vsub.f32 %v151, %v152
    %v154 = vand.u32 %v153, 4294901760
    %155 = vmatpush.msra.mxu0 %v154
    %v156 = vand.u32 %v65, 4294901760
    %157 = vmatmul.f32.gmra.mxu0 %v156
    %v158 = vpop.f32.mrf.mxu0
    %v159 = vadd.f32 %v109, %v158
    %v160 = vand.u32 %v68, 4294901760
    %161 = vmatmul.f32.gmra.mxu0 %v160
    %v162 = vpop.f32.mrf.mxu0
    %v163 = vadd.f32 %v117, %v162
    %v164 = vand.u32 %v71, 4294901760
    %165 = vmatmul.f32.gmra.mxu0 %v164
    %v166 = vpop.f32.mrf.mxu0
    %v167 = vadd.f32 %v125, %v166
    %v168 = vand.u32 %v74, 4294901760
    %169 = vmatmul.f32.gmra.mxu0 %v168
    %v170 = vpop.f32.mrf.mxu0
    %v171 = vadd.f32 %v133, %v170
    %172 = vdwg.mxu0
    %173 = vmatpush.msra.mxu0 0.0
    %174 = vmatpush.msra.mxu0 0.0
    %175 = vmatpush.msra.mxu0 0.0
    %176 = vmatpush.msra.mxu0 0.0
    %177 = vmatpush.msra.mxu0 0.0
    %178 = vmatpush.msra.mxu0 0.0
    %179 = vmatpush.msra.mxu0 0.0
    %180 = vmatpush.msra.mxu0 0.0
    %181 = vmatpush.msra.mxu0 0.0
    %182 = vmatpush.msra.mxu0 0.0
    %183 = vmatpush.msra.mxu0 0.0
    %184 = vmatpush.msra.mxu0 0.0
    %185 = vmatpush.msra.mxu0 0.0
    %186 = vmatpush.msra.mxu0 0.0
    %187 = vmatpush.msra.mxu0 0.0
    %v188 = vand.u32 %v77, 4294901760
    %v189 = vsub.f32 %v77, %v188
    %190 = vmatpush.msra.mxu0 %v189
    %v191 = vand.u32 %v65, 4294901760
    %v192 = vsub.f32 %v65, %v191
    %193 = vmatmul.f32.gmra.mxu0 %v192
    %v194 = vpop.f32.mrf.mxu0
    %v195 = vadd.f32 %v159, %v194
    %v196 = vand.u32 %v68, 4294901760
    %v197 = vsub.f32 %v68, %v196
    %198 = vmatmul.f32.gmra.mxu0 %v197
    %v199 = vpop.f32.mrf.mxu0
    %v200 = vadd.f32 %v163, %v199
    %v201 = vand.u32 %v71, 4294901760
    %v202 = vsub.f32 %v71, %v201
    %203 = vmatmul.f32.gmra.mxu0 %v202
    %v204 = vpop.f32.mrf.mxu0
    %v205 = vadd.f32 %v167, %v204
    %v206 = vand.u32 %v74, 4294901760
    %v207 = vsub.f32 %v74, %v206
    %208 = vmatmul.f32.gmra.mxu0 %v207
    %v209 = vpop.f32.mrf.mxu0
    %v210 = vadd.f32 %v171, %v209
    %211 = vdwg.mxu0
    %212 = vmatpush.msra.mxu0 0.0
    %213 = vmatpush.msra.mxu0 0.0
    %214 = vmatpush.msra.mxu0 0.0
    %215 = vmatpush.msra.mxu0 0.0
    %216 = vmatpush.msra.mxu0 0.0
    %217 = vmatpush.msra.mxu0 0.0
    %218 = vmatpush.msra.mxu0 0.0
    %219 = vmatpush.msra.mxu0 0.0
    %220 = vmatpush.msra.mxu0 0.0
    %221 = vmatpush.msra.mxu0 0.0
    %222 = vmatpush.msra.mxu0 0.0
    %223 = vmatpush.msra.mxu0 0.0
    %224 = vmatpush.msra.mxu0 0.0
    %225 = vmatpush.msra.mxu0 0.0
    %226 = vmatpush.msra.mxu0 0.0
    %v227 = vand.u32 %v77, 4294901760
    %228 = vmatpush.msra.mxu0 %v227
    %v229 = vand.u32 %v65, 4294901760
    %v230 = vsub.f32 %v65, %v229
    %v231 = vand.u32 %v230, 4294901760
    %232 = vmatmul.f32.gmra.mxu0 %v231
    %v233 = vpop.f32.mrf.mxu0
    %v234 = vadd.f32 %v195, %v233
    %v235 = vand.u32 %v68, 4294901760
    %v236 = vsub.f32 %v68, %v235
    %v237 = vand.u32 %v236, 4294901760
    %238 = vmatmul.f32.gmra.mxu0 %v237
    %v239 = vpop.f32.mrf.mxu0
    %v240 = vadd.f32 %v200, %v239
    %v241 = vand.u32 %v71, 4294901760
    %v242 = vsub.f32 %v71, %v241
    %v243 = vand.u32 %v242, 4294901760
    %244 = vmatmul.f32.gmra.mxu0 %v243
    %v245 = vpop.f32.mrf.mxu0
    %v246 = vadd.f32 %v205, %v245
    %v247 = vand.u32 %v74, 4294901760
    %v248 = vsub.f32 %v74, %v247
    %v249 = vand.u32 %v248, 4294901760
    %250 = vmatmul.f32.gmra.mxu0 %v249
    %v251 = vpop.f32.mrf.mxu0
    %v252 = vadd.f32 %v210, %v251
    %253 = vdwg.mxu0
    %254 = vmatpush.msra.mxu0 0.0
    %255 = vmatpush.msra.mxu0 0.0
    %256 = vmatpush.msra.mxu0 0.0
    %257 = vmatpush.msra.mxu0 0.0
    %258 = vmatpush.msra.mxu0 0.0
    %259 = vmatpush.msra.mxu0 0.0
    %260 = vmatpush.msra.mxu0 0.0
    %261 = vmatpush.msra.mxu0 0.0
    %262 = vmatpush.msra.mxu0 0.0
    %263 = vmatpush.msra.mxu0 0.0
    %264 = vmatpush.msra.mxu0 0.0
    %265 = vmatpush.msra.mxu0 0.0
    %266 = vmatpush.msra.mxu0 0.0
    %267 = vmatpush.msra.mxu0 0.0
    %268 = vmatpush.msra.mxu0 0.0
    %v269 = vand.u32 %v77, 4294901760
    %v270 = vsub.f32 %v77, %v269
    %v271 = vand.u32 %v270, 4294901760
    %272 = vmatpush.msra.mxu0 %v271
    %v273 = vand.u32 %v65, 4294901760
    %274 = vmatmul.f32.gmra.mxu0 %v273
    %v275 = vpop.f32.mrf.mxu0
    %v276 = vadd.f32 %v234, %v275
    %v277 = vand.u32 %v68, 4294901760
    %278 = vmatmul.f32.gmra.mxu0 %v277
    %v279 = vpop.f32.mrf.mxu0
    %v280 = vadd.f32 %v240, %v279
    %v281 = vand.u32 %v71, 4294901760
    %282 = vmatmul.f32.gmra.mxu0 %v281
    %v283 = vpop.f32.mrf.mxu0
    %v284 = vadd.f32 %v246, %v283
    %v285 = vand.u32 %v74, 4294901760
    %286 = vmatmul.f32.gmra.mxu0 %v285
    %v287 = vpop.f32.mrf.mxu0
    %v288 = vadd.f32 %v252, %v287
    %289 = vdwg.mxu0
    %290 = vmatpush.msra.mxu0 0.0
    %291 = vmatpush.msra.mxu0 0.0
    %292 = vmatpush.msra.mxu0 0.0
    %293 = vmatpush.msra.mxu0 0.0
    %294 = vmatpush.msra.mxu0 0.0
    %295 = vmatpush.msra.mxu0 0.0
    %296 = vmatpush.msra.mxu0 0.0
    %297 = vmatpush.msra.mxu0 0.0
    %298 = vmatpush.msra.mxu0 0.0
    %299 = vmatpush.msra.mxu0 0.0
    %300 = vmatpush.msra.mxu0 0.0
    %301 = vmatpush.msra.mxu0 0.0
    %302 = vmatpush.msra.mxu0 0.0
    %303 = vmatpush.msra.mxu0 0.0
    %304 = vmatpush.msra.mxu0 0.0
    %v305 = vand.u32 %v77, 4294901760
    %306 = vmatpush.msra.mxu0 %v305
    %v307 = vand.u32 %v65, 4294901760
    %308 = vmatmul.f32.gmra.mxu0 %v307
    %v309 = vpop.f32.mrf.mxu0
    %v310 = vadd.f32 %v276, %v309
    %v311 = vand.u32 %v68, 4294901760
    %312 = vmatmul.f32.gmra.mxu0 %v311
    %v313 = vpop.f32.mrf.mxu0
    %v314 = vadd.f32 %v280, %v313
    %v315 = vand.u32 %v71, 4294901760
    %316 = vmatmul.f32.gmra.mxu0 %v315
    %v317 = vpop.f32.mrf.mxu0
    %v318 = vadd.f32 %v284, %v317
    %v319 = vand.u32 %v74, 4294901760
    %320 = vmatmul.f32.gmra.mxu0 %v319
    %v321 = vpop.f32.mrf.mxu0
    %v322 = vadd.f32 %v288, %v321
    %323 = vdwg.mxu0
    %324 = vmatpush.msra.mxu0 0.0
    %325 = vmatpush.msra.mxu0 0.0
    %326 = vmatpush.msra.mxu0 0.0
    %327 = vmatpush.msra.mxu0 0.0
    %328 = vmatpush.msra.mxu0 0.0
    %329 = vmatpush.msra.mxu0 0.0
    %330 = vmatpush.msra.mxu0 0.0
    %331 = vmatpush.msra.mxu0 0.0
    %332 = vmatpush.msra.mxu0 0.0
    %333 = vmatpush.msra.mxu0 0.0
    %334 = vmatpush.msra.mxu0 0.0
    %335 = vmatpush.msra.mxu0 0.0
    %336 = vmatpush.msra.mxu0 0.0
    %337 = vmatpush.msra.mxu0 0.0
    %338 = vmatpush.msra.mxu0 0.0
    %v339 = vand.u32 %v79, 4294901760
    %340 = vmatpush.msra.mxu0 %v339
    %v341 = vand.u32 %v65, 4294901760
    %v342 = vsub.f32 %v65, %v341
    %v343 = vand.u32 %v342, 4294901760
    %v344 = vsub.f32 %v342, %v343
    %v345 = vand.u32 %v344, 4294901760
    %346 = vmatmul.f32.gmra.mxu0 %v345
    %v347 = vpop.f32.mrf.mxu0
    %v348 = vadd.f32 %v33, %v347
    %v349 = vand.u32 %v68, 4294901760
    %v350 = vsub.f32 %v68, %v349
    %v351 = vand.u32 %v350, 4294901760
    %v352 = vsub.f32 %v350, %v351
    %v353 = vand.u32 %v352, 4294901760
    %354 = vmatmul.f32.gmra.mxu0 %v353
    %v355 = vpop.f32.mrf.mxu0
    %v356 = vadd.f32 %v38, %v355
    %v357 = vand.u32 %v71, 4294901760
    %v358 = vsub.f32 %v71, %v357
    %v359 = vand.u32 %v358, 4294901760
    %v360 = vsub.f32 %v358, %v359
    %v361 = vand.u32 %v360, 4294901760
    %362 = vmatmul.f32.gmra.mxu0 %v361
    %v363 = vpop.f32.mrf.mxu0
    %v364 = vadd.f32 %v43, %v363
    %v365 = vand.u32 %v74, 4294901760
    %v366 = vsub.f32 %v74, %v365
    %v367 = vand.u32 %v366, 4294901760
    %v368 = vsub.f32 %v366, %v367
    %v369 = vand.u32 %v368, 4294901760
    %370 = vmatmul.f32.gmra.mxu0 %v369
    %v371 = vpop.f32.mrf.mxu0
    %v372 = vadd.f32 %v48, %v371
    %373 = vdwg.mxu0
    %374 = vmatpush.msra.mxu0 0.0
    %375 = vmatpush.msra.mxu0 0.0
    %376 = vmatpush.msra.mxu0 0.0
    %377 = vmatpush.msra.mxu0 0.0
    %378 = vmatpush.msra.mxu0 0.0
    %379 = vmatpush.msra.mxu0 0.0
    %380 = vmatpush.msra.mxu0 0.0
    %381 = vmatpush.msra.mxu0 0.0
    %382 = vmatpush.msra.mxu0 0.0
    %383 = vmatpush.msra.mxu0 0.0
    %384 = vmatpush.msra.mxu0 0.0
    %385 = vmatpush.msra.mxu0 0.0
    %386 = vmatpush.msra.mxu0 0.0
    %387 = vmatpush.msra.mxu0 0.0
    %388 = vmatpush.msra.mxu0 0.0
    %v389 = vand.u32 %v79, 4294901760
    %v390 = vsub.f32 %v79, %v389
    %v391 = vand.u32 %v390, 4294901760
    %v392 = vsub.f32 %v390, %v391
    %v393 = vand.u32 %v392, 4294901760
    %394 = vmatpush.msra.mxu0 %v393
    %v395 = vand.u32 %v65, 4294901760
    %396 = vmatmul.f32.gmra.mxu0 %v395
    %v397 = vpop.f32.mrf.mxu0
    %v398 = vadd.f32 %v348, %v397
    %v399 = vand.u32 %v68, 4294901760
    %400 = vmatmul.f32.gmra.mxu0 %v399
    %v401 = vpop.f32.mrf.mxu0
    %v402 = vadd.f32 %v356, %v401
    %v403 = vand.u32 %v71, 4294901760
    %404 = vmatmul.f32.gmra.mxu0 %v403
    %v405 = vpop.f32.mrf.mxu0
    %v406 = vadd.f32 %v364, %v405
    %v407 = vand.u32 %v74, 4294901760
    %408 = vmatmul.f32.gmra.mxu0 %v407
    %v409 = vpop.f32.mrf.mxu0
    %v410 = vadd.f32 %v372, %v409
    %411 = vdwg.mxu0
    %412 = vmatpush.msra.mxu0 0.0
    %413 = vmatpush.msra.mxu0 0.0
    %414 = vmatpush.msra.mxu0 0.0
    %415 = vmatpush.msra.mxu0 0.0
    %416 = vmatpush.msra.mxu0 0.0
    %417 = vmatpush.msra.mxu0 0.0
    %418 = vmatpush.msra.mxu0 0.0
    %419 = vmatpush.msra.mxu0 0.0
    %420 = vmatpush.msra.mxu0 0.0
    %421 = vmatpush.msra.mxu0 0.0
    %422 = vmatpush.msra.mxu0 0.0
    %423 = vmatpush.msra.mxu0 0.0
    %424 = vmatpush.msra.mxu0 0.0
    %425 = vmatpush.msra.mxu0 0.0
    %426 = vmatpush.msra.mxu0 0.0
    %v427 = vand.u32 %v79, 4294901760
    %v428 = vsub.f32 %v79, %v427
    %429 = vmatpush.msra.mxu0 %v428
    %v430 = vand.u32 %v65, 4294901760
    %v431 = vsub.f32 %v65, %v430
    %432 = vmatmul.f32.gmra.mxu0 %v431
    %v433 = vpop.f32.mrf.mxu0
    %v434 = vadd.f32 %v398, %v433
    %v435 = vand.u32 %v68, 4294901760
    %v436 = vsub.f32 %v68, %v435
    %437 = vmatmul.f32.gmra.mxu0 %v436
    %v438 = vpop.f32.mrf.mxu0
    %v439 = vadd.f32 %v402, %v438
    %v440 = vand.u32 %v71, 4294901760
    %v441 = vsub.f32 %v71, %v440
    %442 = vmatmul.f32.gmra.mxu0 %v441
    %v443 = vpop.f32.mrf.mxu0
    %v444 = vadd.f32 %v406, %v443
    %v445 = vand.u32 %v74, 4294901760
    %v446 = vsub.f32 %v74, %v445
    %447 = vmatmul.f32.gmra.mxu0 %v446
    %v448 = vpop.f32.mrf.mxu0
    %v449 = vadd.f32 %v410, %v448
    %450 = vdwg.mxu0
    %451 = vmatpush.msra.mxu0 0.0
    %452 = vmatpush.msra.mxu0 0.0
    %453 = vmatpush.msra.mxu0 0.0
    %454 = vmatpush.msra.mxu0 0.0
    %455 = vmatpush.msra.mxu0 0.0
    %456 = vmatpush.msra.mxu0 0.0
    %457 = vmatpush.msra.mxu0 0.0
    %458 = vmatpush.msra.mxu0 0.0
    %459 = vmatpush.msra.mxu0 0.0
    %460 = vmatpush.msra.mxu0 0.0
    %461 = vmatpush.msra.mxu0 0.0
    %462 = vmatpush.msra.mxu0 0.0
    %463 = vmatpush.msra.mxu0 0.0
    %464 = vmatpush.msra.mxu0 0.0
    %465 = vmatpush.msra.mxu0 0.0
    %v466 = vand.u32 %v79, 4294901760
    %467 = vmatpush.msra.mxu0 %v466
    %v468 = vand.u32 %v65, 4294901760
    %v469 = vsub.f32 %v65, %v468
    %v470 = vand.u32 %v469, 4294901760
    %471 = vmatmul.f32.gmra.mxu0 %v470
    %v472 = vpop.f32.mrf.mxu0
    %v473 = vadd.f32 %v434, %v472
    %v474 = vand.u32 %v68, 4294901760
    %v475 = vsub.f32 %v68, %v474
    %v476 = vand.u32 %v475, 4294901760
    %477 = vmatmul.f32.gmra.mxu0 %v476
    %v478 = vpop.f32.mrf.mxu0
    %v479 = vadd.f32 %v439, %v478
    %v480 = vand.u32 %v71, 4294901760
    %v481 = vsub.f32 %v71, %v480
    %v482 = vand.u32 %v481, 4294901760
    %483 = vmatmul.f32.gmra.mxu0 %v482
    %v484 = vpop.f32.mrf.mxu0
    %v485 = vadd.f32 %v444, %v484
    %v486 = vand.u32 %v74, 4294901760
    %v487 = vsub.f32 %v74, %v486
    %v488 = vand.u32 %v487, 4294901760
    %489 = vmatmul.f32.gmra.mxu0 %v488
    %v490 = vpop.f32.mrf.mxu0
    %v491 = vadd.f32 %v449, %v490
    %492 = vdwg.mxu0
    %493 = vmatpush.msra.mxu0 0.0
    %494 = vmatpush.msra.mxu0 0.0
    %495 = vmatpush.msra.mxu0 0.0
    %496 = vmatpush.msra.mxu0 0.0
    %497 = vmatpush.msra.mxu0 0.0
    %498 = vmatpush.msra.mxu0 0.0
    %499 = vmatpush.msra.mxu0 0.0
    %500 = vmatpush.msra.mxu0 0.0
    %501 = vmatpush.msra.mxu0 0.0
    %502 = vmatpush.msra.mxu0 0.0
    %503 = vmatpush.msra.mxu0 0.0
    %504 = vmatpush.msra.mxu0 0.0
    %505 = vmatpush.msra.mxu0 0.0
    %506 = vmatpush.msra.mxu0 0.0
    %507 = vmatpush.msra.mxu0 0.0
    %v508 = vand.u32 %v79, 4294901760
    %v509 = vsub.f32 %v79, %v508
    %v510 = vand.u32 %v509, 4294901760
    %511 = vmatpush.msra.mxu0 %v510
    %v512 = vand.u32 %v65, 4294901760
    %513 = vmatmul.f32.gmra.mxu0 %v512
    %v514 = vpop.f32.mrf.mxu0
    %v515 = vadd.f32 %v473, %v514
    %v516 = vand.u32 %v68, 4294901760
    %517 = vmatmul.f32.gmra.mxu0 %v516
    %v518 = vpop.f32.mrf.mxu0
    %v519 = vadd.f32 %v479, %v518
    %v520 = vand.u32 %v71, 4294901760
    %521 = vmatmul.f32.gmra.mxu0 %v520
    %v522 = vpop.f32.mrf.mxu0
    %v523 = vadd.f32 %v485, %v522
    %v524 = vand.u32 %v74, 4294901760
    %525 = vmatmul.f32.gmra.mxu0 %v524
    %v526 = vpop.f32.mrf.mxu0
    %v527 = vadd.f32 %v491, %v526
    %528 = vdwg.mxu0
    %529 = vmatpush.msra.mxu0 0.0
    %530 = vmatpush.msra.mxu0 0.0
    %531 = vmatpush.msra.mxu0 0.0
    %532 = vmatpush.msra.mxu0 0.0
    %533 = vmatpush.msra.mxu0 0.0
    %534 = vmatpush.msra.mxu0 0.0
    %535 = vmatpush.msra.mxu0 0.0
    %536 = vmatpush.msra.mxu0 0.0
    %537 = vmatpush.msra.mxu0 0.0
    %538 = vmatpush.msra.mxu0 0.0
    %539 = vmatpush.msra.mxu0 0.0
    %540 = vmatpush.msra.mxu0 0.0
    %541 = vmatpush.msra.mxu0 0.0
    %542 = vmatpush.msra.mxu0 0.0
    %543 = vmatpush.msra.mxu0 0.0
    %v544 = vand.u32 %v79, 4294901760
    %545 = vmatpush.msra.mxu0 %v544
    %v546 = vand.u32 %v65, 4294901760
    %547 = vmatmul.f32.gmra.mxu0 %v546
    %v548 = vpop.f32.mrf.mxu0
    %v549 = vadd.f32 %v515, %v548
    %v550 = vand.u32 %v68, 4294901760
    %551 = vmatmul.f32.gmra.mxu0 %v550
    %v552 = vpop.f32.mrf.mxu0
    %v553 = vadd.f32 %v519, %v552
    %v554 = vand.u32 %v71, 4294901760
    %555 = vmatmul.f32.gmra.mxu0 %v554
    %v556 = vpop.f32.mrf.mxu0
    %v557 = vadd.f32 %v523, %v556
    %v558 = vand.u32 %v74, 4294901760
    %559 = vmatmul.f32.gmra.mxu0 %v558
    %v560 = vpop.f32.mrf.mxu0
    %v561 = vadd.f32 %v527, %v560
    %562 = vdwg.mxu0
    %563 = vmatpush.msra.mxu0 0.0
    %564 = vmatpush.msra.mxu0 0.0
    %565 = vmatpush.msra.mxu0 0.0
    %566 = vmatpush.msra.mxu0 0.0
    %567 = vmatpush.msra.mxu0 0.0
    %568 = vmatpush.msra.mxu0 0.0
    %569 = vmatpush.msra.mxu0 0.0
    %570 = vmatpush.msra.mxu0 0.0
    %571 = vmatpush.msra.mxu0 0.0
    %572 = vmatpush.msra.mxu0 0.0
    %573 = vmatpush.msra.mxu0 0.0
    %574 = vmatpush.msra.mxu0 0.0
    %575 = vmatpush.msra.mxu0 0.0
    %576 = vmatpush.msra.mxu0 0.0
    %577 = vmatpush.msra.mxu0 0.0
    %v578 = vand.u32 %v81, 4294901760
    %579 = vmatpush.msra.mxu0 %v578
    %v580 = vand.u32 %v65, 4294901760
    %v581 = vsub.f32 %v65, %v580
    %v582 = vand.u32 %v581, 4294901760
    %v583 = vsub.f32 %v581, %v582
    %v584 = vand.u32 %v583, 4294901760
    %585 = vmatmul.f32.gmra.mxu0 %v584
    %v586 = vpop.f32.mrf.mxu0
    %v587 = vadd.f32 %v33, %v586
    %v588 = vand.u32 %v68, 4294901760
    %v589 = vsub.f32 %v68, %v588
    %v590 = vand.u32 %v589, 4294901760
    %v591 = vsub.f32 %v589, %v590
    %v592 = vand.u32 %v591, 4294901760
    %593 = vmatmul.f32.gmra.mxu0 %v592
    %v594 = vpop.f32.mrf.mxu0
    %v595 = vadd.f32 %v38, %v594
    %v596 = vand.u32 %v71, 4294901760
    %v597 = vsub.f32 %v71, %v596
    %v598 = vand.u32 %v597, 4294901760
    %v599 = vsub.f32 %v597, %v598
    %v600 = vand.u32 %v599, 4294901760
    %601 = vmatmul.f32.gmra.mxu0 %v600
    %v602 = vpop.f32.mrf.mxu0
    %v603 = vadd.f32 %v43, %v602
    %v604 = vand.u32 %v74, 4294901760
    %v605 = vsub.f32 %v74, %v604
    %v606 = vand.u32 %v605, 4294901760
    %v607 = vsub.f32 %v605, %v606
    %v608 = vand.u32 %v607, 4294901760
    %609 = vmatmul.f32.gmra.mxu0 %v608
    %v610 = vpop.f32.mrf.mxu0
    %v611 = vadd.f32 %v48, %v610
    %612 = vdwg.mxu0
    %613 = vmatpush.msra.mxu0 0.0
    %614 = vmatpush.msra.mxu0 0.0
    %615 = vmatpush.msra.mxu0 0.0
    %616 = vmatpush.msra.mxu0 0.0
    %617 = vmatpush.msra.mxu0 0.0
    %618 = vmatpush.msra.mxu0 0.0
    %619 = vmatpush.msra.mxu0 0.0
    %620 = vmatpush.msra.mxu0 0.0
    %621 = vmatpush.msra.mxu0 0.0
    %622 = vmatpush.msra.mxu0 0.0
    %623 = vmatpush.msra.mxu0 0.0
    %624 = vmatpush.msra.mxu0 0.0
    %625 = vmatpush.msra.mxu0 0.0
    %626 = vmatpush.msra.mxu0 0.0
    %627 = vmatpush.msra.mxu0 0.0
    %v628 = vand.u32 %v81, 4294901760
    %v629 = vsub.f32 %v81, %v628
    %v630 = vand.u32 %v629, 4294901760
    %v631 = vsub.f32 %v629, %v630
    %v632 = vand.u32 %v631, 4294901760
    %633 = vmatpush.msra.mxu0 %v632
    %v634 = vand.u32 %v65, 4294901760
    %635 = vmatmul.f32.gmra.mxu0 %v634
    %v636 = vpop.f32.mrf.mxu0
    %v637 = vadd.f32 %v587, %v636
    %v638 = vand.u32 %v68, 4294901760
    %639 = vmatmul.f32.gmra.mxu0 %v638
    %v640 = vpop.f32.mrf.mxu0
    %v641 = vadd.f32 %v595, %v640
    %v642 = vand.u32 %v71, 4294901760
    %643 = vmatmul.f32.gmra.mxu0 %v642
    %v644 = vpop.f32.mrf.mxu0
    %v645 = vadd.f32 %v603, %v644
    %v646 = vand.u32 %v74, 4294901760
    %647 = vmatmul.f32.gmra.mxu0 %v646
    %v648 = vpop.f32.mrf.mxu0
    %v649 = vadd.f32 %v611, %v648
    %650 = vdwg.mxu0
    %651 = vmatpush.msra.mxu0 0.0
    %652 = vmatpush.msra.mxu0 0.0
    %653 = vmatpush.msra.mxu0 0.0
    %654 = vmatpush.msra.mxu0 0.0
    %655 = vmatpush.msra.mxu0 0.0
    %656 = vmatpush.msra.mxu0 0.0
    %657 = vmatpush.msra.mxu0 0.0
    %658 = vmatpush.msra.mxu0 0.0
    %659 = vmatpush.msra.mxu0 0.0
    %660 = vmatpush.msra.mxu0 0.0
    %661 = vmatpush.msra.mxu0 0.0
    %662 = vmatpush.msra.mxu0 0.0
    %663 = vmatpush.msra.mxu0 0.0
    %664 = vmatpush.msra.mxu0 0.0
    %665 = vmatpush.msra.mxu0 0.0
    %v666 = vand.u32 %v81, 4294901760
    %v667 = vsub.f32 %v81, %v666
    %668 = vmatpush.msra.mxu0 %v667
    %v669 = vand.u32 %v65, 4294901760
    %v670 = vsub.f32 %v65, %v669
    %671 = vmatmul.f32.gmra.mxu0 %v670
    %v672 = vpop.f32.mrf.mxu0
    %v673 = vadd.f32 %v637, %v672
    %v674 = vand.u32 %v68, 4294901760
    %v675 = vsub.f32 %v68, %v674
    %676 = vmatmul.f32.gmra.mxu0 %v675
    %v677 = vpop.f32.mrf.mxu0
    %v678 = vadd.f32 %v641, %v677
    %v679 = vand.u32 %v71, 4294901760
    %v680 = vsub.f32 %v71, %v679
    %681 = vmatmul.f32.gmra.mxu0 %v680
    %v682 = vpop.f32.mrf.mxu0
    %v683 = vadd.f32 %v645, %v682
    %v684 = vand.u32 %v74, 4294901760
    %v685 = vsub.f32 %v74, %v684
    %686 = vmatmul.f32.gmra.mxu0 %v685
    %v687 = vpop.f32.mrf.mxu0
    %v688 = vadd.f32 %v649, %v687
    %689 = vdwg.mxu0
    %690 = vmatpush.msra.mxu0 0.0
    %691 = vmatpush.msra.mxu0 0.0
    %692 = vmatpush.msra.mxu0 0.0
    %693 = vmatpush.msra.mxu0 0.0
    %694 = vmatpush.msra.mxu0 0.0
    %695 = vmatpush.msra.mxu0 0.0
    %696 = vmatpush.msra.mxu0 0.0
    %697 = vmatpush.msra.mxu0 0.0
    %698 = vmatpush.msra.mxu0 0.0
    %699 = vmatpush.msra.mxu0 0.0
    %700 = vmatpush.msra.mxu0 0.0
    %701 = vmatpush.msra.mxu0 0.0
    %702 = vmatpush.msra.mxu0 0.0
    %703 = vmatpush.msra.mxu0 0.0
    %704 = vmatpush.msra.mxu0 0.0
    %v705 = vand.u32 %v81, 4294901760
    %706 = vmatpush.msra.mxu0 %v705
    %v707 = vand.u32 %v65, 4294901760
    %v708 = vsub.f32 %v65, %v707
    %v709 = vand.u32 %v708, 4294901760
    %710 = vmatmul.f32.gmra.mxu0 %v709
    %v711 = vpop.f32.mrf.mxu0
    %v712 = vadd.f32 %v673, %v711
    %v713 = vand.u32 %v68, 4294901760
    %v714 = vsub.f32 %v68, %v713
    %v715 = vand.u32 %v714, 4294901760
    %716 = vmatmul.f32.gmra.mxu0 %v715
    %v717 = vpop.f32.mrf.mxu0
    %v718 = vadd.f32 %v678, %v717
    %v719 = vand.u32 %v71, 4294901760
    %v720 = vsub.f32 %v71, %v719
    %v721 = vand.u32 %v720, 4294901760
    %722 = vmatmul.f32.gmra.mxu0 %v721
    %v723 = vpop.f32.mrf.mxu0
    %v724 = vadd.f32 %v683, %v723
    %v725 = vand.u32 %v74, 4294901760
    %v726 = vsub.f32 %v74, %v725
    %v727 = vand.u32 %v726, 4294901760
    %728 = vmatmul.f32.gmra.mxu0 %v727
    %v729 = vpop.f32.mrf.mxu0
    %v730 = vadd.f32 %v688, %v729
    %731 = vdwg.mxu0
    %732 = vmatpush.msra.mxu0 0.0
    %733 = vmatpush.msra.mxu0 0.0
    %734 = vmatpush.msra.mxu0 0.0
    %735 = vmatpush.msra.mxu0 0.0
    %736 = vmatpush.msra.mxu0 0.0
    %737 = vmatpush.msra.mxu0 0.0
    %738 = vmatpush.msra.mxu0 0.0
    %739 = vmatpush.msra.mxu0 0.0
    %740 = vmatpush.msra.mxu0 0.0
    %741 = vmatpush.msra.mxu0 0.0
    %742 = vmatpush.msra.mxu0 0.0
    %743 = vmatpush.msra.mxu0 0.0
    %744 = vmatpush.msra.mxu0 0.0
    %745 = vmatpush.msra.mxu0 0.0
    %746 = vmatpush.msra.mxu0 0.0
    %v747 = vand.u32 %v81, 4294901760
    %v748 = vsub.f32 %v81, %v747
    %v749 = vand.u32 %v748, 4294901760
    %750 = vmatpush.msra.mxu0 %v749
    %v751 = vand.u32 %v65, 4294901760
    %752 = vmatmul.f32.gmra.mxu0 %v751
    %v753 = vpop.f32.mrf.mxu0
    %v754 = vadd.f32 %v712, %v753
    %v755 = vand.u32 %v68, 4294901760
    %756 = vmatmul.f32.gmra.mxu0 %v755
    %v757 = vpop.f32.mrf.mxu0
    %v758 = vadd.f32 %v718, %v757
    %v759 = vand.u32 %v71, 4294901760
    %760 = vmatmul.f32.gmra.mxu0 %v759
    %v761 = vpop.f32.mrf.mxu0
    %v762 = vadd.f32 %v724, %v761
    %v763 = vand.u32 %v74, 4294901760
    %764 = vmatmul.f32.gmra.mxu0 %v763
    %v765 = vpop.f32.mrf.mxu0
    %v766 = vadd.f32 %v730, %v765
    %767 = vdwg.mxu0
    %768 = vmatpush.msra.mxu0 0.0
    %769 = vmatpush.msra.mxu0 0.0
    %770 = vmatpush.msra.mxu0 0.0
    %771 = vmatpush.msra.mxu0 0.0
    %772 = vmatpush.msra.mxu0 0.0
    %773 = vmatpush.msra.mxu0 0.0
    %774 = vmatpush.msra.mxu0 0.0
    %775 = vmatpush.msra.mxu0 0.0
    %776 = vmatpush.msra.mxu0 0.0
    %777 = vmatpush.msra.mxu0 0.0
    %778 = vmatpush.msra.mxu0 0.0
    %779 = vmatpush.msra.mxu0 0.0
    %780 = vmatpush.msra.mxu0 0.0
    %781 = vmatpush.msra.mxu0 0.0
    %782 = vmatpush.msra.mxu0 0.0
    %v783 = vand.u32 %v81, 4294901760
    %784 = vmatpush.msra.mxu0 %v783
    %v785 = vand.u32 %v65, 4294901760
    %786 = vmatmul.f32.gmra.mxu0 %v785
    %v787 = vpop.f32.mrf.mxu0
    %v788 = vadd.f32 %v754, %v787
    %v789 = vand.u32 %v68, 4294901760
    %790 = vmatmul.f32.gmra.mxu0 %v789
    %v791 = vpop.f32.mrf.mxu0
    %v792 = vadd.f32 %v758, %v791
    %v793 = vand.u32 %v71, 4294901760
    %794 = vmatmul.f32.gmra.mxu0 %v793
    %v795 = vpop.f32.mrf.mxu0
    %v796 = vadd.f32 %v762, %v795
    %v797 = vand.u32 %v74, 4294901760
    %798 = vmatmul.f32.gmra.mxu0 %v797
    %v799 = vpop.f32.mrf.mxu0
    %v800 = vadd.f32 %v766, %v799
    %801 = vdwg.mxu0
    %802 = vmatpush.msra.mxu0 0.0
    %803 = vmatpush.msra.mxu0 0.0
    %804 = vmatpush.msra.mxu0 0.0
    %805 = vmatpush.msra.mxu0 0.0
    %806 = vmatpush.msra.mxu0 0.0
    %807 = vmatpush.msra.mxu0 0.0
    %808 = vmatpush.msra.mxu0 0.0
    %809 = vmatpush.msra.mxu0 0.0
    %810 = vmatpush.msra.mxu0 0.0
    %811 = vmatpush.msra.mxu0 0.0
    %812 = vmatpush.msra.mxu0 0.0
    %813 = vmatpush.msra.mxu0 0.0
    %814 = vmatpush.msra.mxu0 0.0
    %815 = vmatpush.msra.mxu0 0.0
    %816 = vmatpush.msra.mxu0 0.0
    %v817 = vand.u32 %v83, 4294901760
    %818 = vmatpush.msra.mxu0 %v817
    %v819 = vand.u32 %v65, 4294901760
    %v820 = vsub.f32 %v65, %v819
    %v821 = vand.u32 %v820, 4294901760
    %v822 = vsub.f32 %v820, %v821
    %v823 = vand.u32 %v822, 4294901760
    %824 = vmatmul.f32.gmra.mxu0 %v823
    %v825 = vpop.f32.mrf.mxu0
    %v826 = vadd.f32 %v33, %v825
    %v827 = vand.u32 %v68, 4294901760
    %v828 = vsub.f32 %v68, %v827
    %v829 = vand.u32 %v828, 4294901760
    %v830 = vsub.f32 %v828, %v829
    %v831 = vand.u32 %v830, 4294901760
    %832 = vmatmul.f32.gmra.mxu0 %v831
    %v833 = vpop.f32.mrf.mxu0
    %v834 = vadd.f32 %v38, %v833
    %v835 = vand.u32 %v71, 4294901760
    %v836 = vsub.f32 %v71, %v835
    %v837 = vand.u32 %v836, 4294901760
    %v838 = vsub.f32 %v836, %v837
    %v839 = vand.u32 %v838, 4294901760
    %840 = vmatmul.f32.gmra.mxu0 %v839
    %v841 = vpop.f32.mrf.mxu0
    %v842 = vadd.f32 %v43, %v841
    %v843 = vand.u32 %v74, 4294901760
    %v844 = vsub.f32 %v74, %v843
    %v845 = vand.u32 %v844, 4294901760
    %v846 = vsub.f32 %v844, %v845
    %v847 = vand.u32 %v846, 4294901760
    %848 = vmatmul.f32.gmra.mxu0 %v847
    %v849 = vpop.f32.mrf.mxu0
    %v850 = vadd.f32 %v48, %v849
    %851 = vdwg.mxu0
    %852 = vmatpush.msra.mxu0 0.0
    %853 = vmatpush.msra.mxu0 0.0
    %854 = vmatpush.msra.mxu0 0.0
    %855 = vmatpush.msra.mxu0 0.0
    %856 = vmatpush.msra.mxu0 0.0
    %857 = vmatpush.msra.mxu0 0.0
    %858 = vmatpush.msra.mxu0 0.0
    %859 = vmatpush.msra.mxu0 0.0
    %860 = vmatpush.msra.mxu0 0.0
    %861 = vmatpush.msra.mxu0 0.0
    %862 = vmatpush.msra.mxu0 0.0
    %863 = vmatpush.msra.mxu0 0.0
    %864 = vmatpush.msra.mxu0 0.0
    %865 = vmatpush.msra.mxu0 0.0
    %866 = vmatpush.msra.mxu0 0.0
    %v867 = vand.u32 %v83, 4294901760
    %v868 = vsub.f32 %v83, %v867
    %v869 = vand.u32 %v868, 4294901760
    %v870 = vsub.f32 %v868, %v869
    %v871 = vand.u32 %v870, 4294901760
    %872 = vmatpush.msra.mxu0 %v871
    %v873 = vand.u32 %v65, 4294901760
    %874 = vmatmul.f32.gmra.mxu0 %v873
    %v875 = vpop.f32.mrf.mxu0
    %v876 = vadd.f32 %v826, %v875
    %v877 = vand.u32 %v68, 4294901760
    %878 = vmatmul.f32.gmra.mxu0 %v877
    %v879 = vpop.f32.mrf.mxu0
    %v880 = vadd.f32 %v834, %v879
    %v881 = vand.u32 %v71, 4294901760
    %882 = vmatmul.f32.gmra.mxu0 %v881
    %v883 = vpop.f32.mrf.mxu0
    %v884 = vadd.f32 %v842, %v883
    %v885 = vand.u32 %v74, 4294901760
    %886 = vmatmul.f32.gmra.mxu0 %v885
    %v887 = vpop.f32.mrf.mxu0
    %v888 = vadd.f32 %v850, %v887
    %889 = vdwg.mxu0
    %890 = vmatpush.msra.mxu0 0.0
    %891 = vmatpush.msra.mxu0 0.0
    %892 = vmatpush.msra.mxu0 0.0
    %893 = vmatpush.msra.mxu0 0.0
    %894 = vmatpush.msra.mxu0 0.0
    %895 = vmatpush.msra.mxu0 0.0
    %896 = vmatpush.msra.mxu0 0.0
    %897 = vmatpush.msra.mxu0 0.0
    %898 = vmatpush.msra.mxu0 0.0
    %899 = vmatpush.msra.mxu0 0.0
    %900 = vmatpush.msra.mxu0 0.0
    %901 = vmatpush.msra.mxu0 0.0
    %902 = vmatpush.msra.mxu0 0.0
    %903 = vmatpush.msra.mxu0 0.0
    %904 = vmatpush.msra.mxu0 0.0
    %v905 = vand.u32 %v83, 4294901760
    %v906 = vsub.f32 %v83, %v905
    %907 = vmatpush.msra.mxu0 %v906
    %v908 = vand.u32 %v65, 4294901760
    %v909 = vsub.f32 %v65, %v908
    %910 = vmatmul.f32.gmra.mxu0 %v909
    %v911 = vpop.f32.mrf.mxu0
    %v912 = vadd.f32 %v876, %v911
    %v913 = vand.u32 %v68, 4294901760
    %v914 = vsub.f32 %v68, %v913
    %915 = vmatmul.f32.gmra.mxu0 %v914
    %v916 = vpop.f32.mrf.mxu0
    %v917 = vadd.f32 %v880, %v916
    %v918 = vand.u32 %v71, 4294901760
    %v919 = vsub.f32 %v71, %v918
    %920 = vmatmul.f32.gmra.mxu0 %v919
    %v921 = vpop.f32.mrf.mxu0
    %v922 = vadd.f32 %v884, %v921
    %v923 = vand.u32 %v74, 4294901760
    %v924 = vsub.f32 %v74, %v923
    %925 = vmatmul.f32.gmra.mxu0 %v924
    %v926 = vpop.f32.mrf.mxu0
    %v927 = vadd.f32 %v888, %v926
    %928 = vdwg.mxu0
    %929 = vmatpush.msra.mxu0 0.0
    %930 = vmatpush.msra.mxu0 0.0
    %931 = vmatpush.msra.mxu0 0.0
    %932 = vmatpush.msra.mxu0 0.0
    %933 = vmatpush.msra.mxu0 0.0
    %934 = vmatpush.msra.mxu0 0.0
    %935 = vmatpush.msra.mxu0 0.0
    %936 = vmatpush.msra.mxu0 0.0
    %937 = vmatpush.msra.mxu0 0.0
    %938 = vmatpush.msra.mxu0 0.0
    %939 = vmatpush.msra.mxu0 0.0
    %940 = vmatpush.msra.mxu0 0.0
    %941 = vmatpush.msra.mxu0 0.0
    %942 = vmatpush.msra.mxu0 0.0
    %943 = vmatpush.msra.mxu0 0.0
    %v944 = vand.u32 %v83, 4294901760
    %945 = vmatpush.msra.mxu0 %v944
    %v946 = vand.u32 %v65, 4294901760
    %v947 = vsub.f32 %v65, %v946
    %v948 = vand.u32 %v947, 4294901760
    %949 = vmatmul.f32.gmra.mxu0 %v948
    %v950 = vpop.f32.mrf.mxu0
    %v951 = vadd.f32 %v912, %v950
    %v952 = vand.u32 %v68, 4294901760
    %v953 = vsub.f32 %v68, %v952
    %v954 = vand.u32 %v953, 4294901760
    %955 = vmatmul.f32.gmra.mxu0 %v954
    %v956 = vpop.f32.mrf.mxu0
    %v957 = vadd.f32 %v917, %v956
    %v958 = vand.u32 %v71, 4294901760
    %v959 = vsub.f32 %v71, %v958
    %v960 = vand.u32 %v959, 4294901760
    %961 = vmatmul.f32.gmra.mxu0 %v960
    %v962 = vpop.f32.mrf.mxu0
    %v963 = vadd.f32 %v922, %v962
    %v964 = vand.u32 %v74, 4294901760
    %v965 = vsub.f32 %v74, %v964
    %v966 = vand.u32 %v965, 4294901760
    %967 = vmatmul.f32.gmra.mxu0 %v966
    %v968 = vpop.f32.mrf.mxu0
    %v969 = vadd.f32 %v927, %v968
    %970 = vdwg.mxu0
    %971 = vmatpush.msra.mxu0 0.0
    %972 = vmatpush.msra.mxu0 0.0
    %973 = vmatpush.msra.mxu0 0.0
    %974 = vmatpush.msra.mxu0 0.0
    %975 = vmatpush.msra.mxu0 0.0
    %976 = vmatpush.msra.mxu0 0.0
    %977 = vmatpush.msra.mxu0 0.0
    %978 = vmatpush.msra.mxu0 0.0
    %979 = vmatpush.msra.mxu0 0.0
    %980 = vmatpush.msra.mxu0 0.0
    %981 = vmatpush.msra.mxu0 0.0
    %982 = vmatpush.msra.mxu0 0.0
    %983 = vmatpush.msra.mxu0 0.0
    %984 = vmatpush.msra.mxu0 0.0
    %985 = vmatpush.msra.mxu0 0.0
    %v986 = vand.u32 %v83, 4294901760
    %v987 = vsub.f32 %v83, %v986
    %v988 = vand.u32 %v987, 4294901760
    %989 = vmatpush.msra.mxu0 %v988
    %v990 = vand.u32 %v65, 4294901760
    %991 = vmatmul.f32.gmra.mxu0 %v990
    %v992 = vpop.f32.mrf.mxu0
    %v993 = vadd.f32 %v951, %v992
    %v994 = vand.u32 %v68, 4294901760
    %995 = vmatmul.f32.gmra.mxu0 %v994
    %v996 = vpop.f32.mrf.mxu0
    %v997 = vadd.f32 %v957, %v996
    %v998 = vand.u32 %v71, 4294901760
    %999 = vmatmul.f32.gmra.mxu0 %v998
    %v1000 = vpop.f32.mrf.mxu0
    %v1001 = vadd.f32 %v963, %v1000
    %v1002 = vand.u32 %v74, 4294901760
    %1003 = vmatmul.f32.gmra.mxu0 %v1002
    %v1004 = vpop.f32.mrf.mxu0
    %v1005 = vadd.f32 %v969, %v1004
    %1006 = vdwg.mxu0
    %1007 = vmatpush.msra.mxu0 0.0
    %1008 = vmatpush.msra.mxu0 0.0
    %1009 = vmatpush.msra.mxu0 0.0
    %1010 = vmatpush.msra.mxu0 0.0
    %1011 = vmatpush.msra.mxu0 0.0
    %1012 = vmatpush.msra.mxu0 0.0
    %1013 = vmatpush.msra.mxu0 0.0
    %1014 = vmatpush.msra.mxu0 0.0
    %1015 = vmatpush.msra.mxu0 0.0
    %1016 = vmatpush.msra.mxu0 0.0
    %1017 = vmatpush.msra.mxu0 0.0
    %1018 = vmatpush.msra.mxu0 0.0
    %1019 = vmatpush.msra.mxu0 0.0
    %1020 = vmatpush.msra.mxu0 0.0
    %1021 = vmatpush.msra.mxu0 0.0
    %v1022 = vand.u32 %v83, 4294901760
    %1023 = vmatpush.msra.mxu0 %v1022
    %v1024 = vand.u32 %v65, 4294901760
    %1025 = vmatmul.f32.gmra.mxu0 %v1024
    %v1026 = vpop.f32.mrf.mxu0
    %v1027 = vadd.f32 %v993, %v1026
    %v1028 = vand.u32 %v68, 4294901760
    %1029 = vmatmul.f32.gmra.mxu0 %v1028
    %v1030 = vpop.f32.mrf.mxu0
    %v1031 = vadd.f32 %v997, %v1030
    %v1032 = vand.u32 %v71, 4294901760
    %1033 = vmatmul.f32.gmra.mxu0 %v1032
    %v1034 = vpop.f32.mrf.mxu0
    %v1035 = vadd.f32 %v1001, %v1034
    %v1036 = vand.u32 %v74, 4294901760
    %1037 = vmatmul.f32.gmra.mxu0 %v1036
    %v1038 = vpop.f32.mrf.mxu0
    %v1039 = vadd.f32 %v1005, %v1038
    %1040 = vdwg.mxu0
    %v1041 = vmax.f32 %v310, 0.0
    %v1042 = vmax.f32 %v549, 0.0
    %v1043 = vmax.f32 %v788, 0.0
    %v1044 = vmax.f32 %v1027, 0.0
    %v1045 = vmax.f32 %v314, 0.0
    %v1046 = vmax.f32 %v553, 0.0
    %v1047 = vmax.f32 %v792, 0.0
    %v1048 = vmax.f32 %v1031, 0.0
    %v1049 = vmax.f32 %v318, 0.0
    %v1050 = vmax.f32 %v557, 0.0
    %v1051 = vmax.f32 %v796, 0.0
    %v1052 = vmax.f32 %v1035, 0.0
    %v1053 = vmax.f32 %v322, 0.0
    %v1054 = vmax.f32 %v561, 0.0
    %v1055 = vmax.f32 %v800, 0.0
    %v1056 = vmax.f32 %v1039, 0.0
    %vm1057 = vcmask 244736
    %v1059 = vsel %vm1057, %v25, 0
    %vm1061 = vcmask 1045504
    %v1063 = vsel %vm1061, %v1053, 0
    %v1066 = vsel %vm1061, %v1054, 0
    %v1069 = vsel %vm1061, %v1055, 0
    %v1072 = vsel %vm1061, %v1056, 0
    %1074 = vmatpush.msra.mxu0 0.0
    %1075 = vmatpush.msra.mxu0 0.0
    %1076 = vmatpush.msra.mxu0 0.0
    %1077 = vmatpush.msra.mxu0 0.0
    %1078 = vmatpush.msra.mxu0 0.0
    %1079 = vmatpush.msra.mxu0 0.0
    %1080 = vmatpush.msra.mxu0 0.0
    %1081 = vmatpush.msra.mxu0 0.0
    %1082 = vmatpush.msra.mxu0 0.0
    %1083 = vmatpush.msra.mxu0 0.0
    %1084 = vmatpush.msra.mxu0 0.0
    %1085 = vmatpush.msra.mxu0 0.0
    %v1086 = vand.u32 %v1063, 4294901760
    %1087 = vmatpush.msra.mxu0 %v1086
    %v1088 = vand.u32 %v1049, 4294901760
    %1089 = vmatpush.msra.mxu0 %v1088
    %v1090 = vand.u32 %v1045, 4294901760
    %1091 = vmatpush.msra.mxu0 %v1090
    %v1092 = vand.u32 %v1041, 4294901760
    %1093 = vmatpush.msra.mxu0 %v1092
    %v1094 = vand.u32 %v1059, 4294901760
    %v1095 = vsub.f32 %v1059, %v1094
    %v1096 = vand.u32 %v1095, 4294901760
    %v1097 = vsub.f32 %v1095, %v1096
    %v1098 = vand.u32 %v1097, 4294901760
    %1099 = vmatmul.f32.gmra.mxu0 %v1098
    %v1100 = vpop.f32.mrf.mxu0
    %v1101 = vadd.f32 %v54, %v1100
    %1102 = vdwg.mxu0
    %1103 = vmatpush.msra.mxu0 0.0
    %1104 = vmatpush.msra.mxu0 0.0
    %1105 = vmatpush.msra.mxu0 0.0
    %1106 = vmatpush.msra.mxu0 0.0
    %1107 = vmatpush.msra.mxu0 0.0
    %1108 = vmatpush.msra.mxu0 0.0
    %1109 = vmatpush.msra.mxu0 0.0
    %1110 = vmatpush.msra.mxu0 0.0
    %1111 = vmatpush.msra.mxu0 0.0
    %1112 = vmatpush.msra.mxu0 0.0
    %1113 = vmatpush.msra.mxu0 0.0
    %1114 = vmatpush.msra.mxu0 0.0
    %v1115 = vand.u32 %v1063, 4294901760
    %v1116 = vsub.f32 %v1063, %v1115
    %v1117 = vand.u32 %v1116, 4294901760
    %v1118 = vsub.f32 %v1116, %v1117
    %v1119 = vand.u32 %v1118, 4294901760
    %1120 = vmatpush.msra.mxu0 %v1119
    %v1121 = vand.u32 %v1049, 4294901760
    %v1122 = vsub.f32 %v1049, %v1121
    %v1123 = vand.u32 %v1122, 4294901760
    %v1124 = vsub.f32 %v1122, %v1123
    %v1125 = vand.u32 %v1124, 4294901760
    %1126 = vmatpush.msra.mxu0 %v1125
    %v1127 = vand.u32 %v1045, 4294901760
    %v1128 = vsub.f32 %v1045, %v1127
    %v1129 = vand.u32 %v1128, 4294901760
    %v1130 = vsub.f32 %v1128, %v1129
    %v1131 = vand.u32 %v1130, 4294901760
    %1132 = vmatpush.msra.mxu0 %v1131
    %v1133 = vand.u32 %v1041, 4294901760
    %v1134 = vsub.f32 %v1041, %v1133
    %v1135 = vand.u32 %v1134, 4294901760
    %v1136 = vsub.f32 %v1134, %v1135
    %v1137 = vand.u32 %v1136, 4294901760
    %1138 = vmatpush.msra.mxu0 %v1137
    %v1139 = vand.u32 %v1059, 4294901760
    %1140 = vmatmul.f32.gmra.mxu0 %v1139
    %v1141 = vpop.f32.mrf.mxu0
    %v1142 = vadd.f32 %v1101, %v1141
    %1143 = vdwg.mxu0
    %1144 = vmatpush.msra.mxu0 0.0
    %1145 = vmatpush.msra.mxu0 0.0
    %1146 = vmatpush.msra.mxu0 0.0
    %1147 = vmatpush.msra.mxu0 0.0
    %1148 = vmatpush.msra.mxu0 0.0
    %1149 = vmatpush.msra.mxu0 0.0
    %1150 = vmatpush.msra.mxu0 0.0
    %1151 = vmatpush.msra.mxu0 0.0
    %1152 = vmatpush.msra.mxu0 0.0
    %1153 = vmatpush.msra.mxu0 0.0
    %1154 = vmatpush.msra.mxu0 0.0
    %1155 = vmatpush.msra.mxu0 0.0
    %v1156 = vand.u32 %v1063, 4294901760
    %v1157 = vsub.f32 %v1063, %v1156
    %1158 = vmatpush.msra.mxu0 %v1157
    %v1159 = vand.u32 %v1049, 4294901760
    %v1160 = vsub.f32 %v1049, %v1159
    %1161 = vmatpush.msra.mxu0 %v1160
    %v1162 = vand.u32 %v1045, 4294901760
    %v1163 = vsub.f32 %v1045, %v1162
    %1164 = vmatpush.msra.mxu0 %v1163
    %v1165 = vand.u32 %v1041, 4294901760
    %v1166 = vsub.f32 %v1041, %v1165
    %1167 = vmatpush.msra.mxu0 %v1166
    %v1168 = vand.u32 %v1059, 4294901760
    %v1169 = vsub.f32 %v1059, %v1168
    %1170 = vmatmul.f32.gmra.mxu0 %v1169
    %v1171 = vpop.f32.mrf.mxu0
    %v1172 = vadd.f32 %v1142, %v1171
    %1173 = vdwg.mxu0
    %1174 = vmatpush.msra.mxu0 0.0
    %1175 = vmatpush.msra.mxu0 0.0
    %1176 = vmatpush.msra.mxu0 0.0
    %1177 = vmatpush.msra.mxu0 0.0
    %1178 = vmatpush.msra.mxu0 0.0
    %1179 = vmatpush.msra.mxu0 0.0
    %1180 = vmatpush.msra.mxu0 0.0
    %1181 = vmatpush.msra.mxu0 0.0
    %1182 = vmatpush.msra.mxu0 0.0
    %1183 = vmatpush.msra.mxu0 0.0
    %1184 = vmatpush.msra.mxu0 0.0
    %1185 = vmatpush.msra.mxu0 0.0
    %v1186 = vand.u32 %v1063, 4294901760
    %1187 = vmatpush.msra.mxu0 %v1186
    %v1188 = vand.u32 %v1049, 4294901760
    %1189 = vmatpush.msra.mxu0 %v1188
    %v1190 = vand.u32 %v1045, 4294901760
    %1191 = vmatpush.msra.mxu0 %v1190
    %v1192 = vand.u32 %v1041, 4294901760
    %1193 = vmatpush.msra.mxu0 %v1192
    %v1194 = vand.u32 %v1059, 4294901760
    %v1195 = vsub.f32 %v1059, %v1194
    %v1196 = vand.u32 %v1195, 4294901760
    %1197 = vmatmul.f32.gmra.mxu0 %v1196
    %v1198 = vpop.f32.mrf.mxu0
    %v1199 = vadd.f32 %v1172, %v1198
    %1200 = vdwg.mxu0
    %1201 = vmatpush.msra.mxu0 0.0
    %1202 = vmatpush.msra.mxu0 0.0
    %1203 = vmatpush.msra.mxu0 0.0
    %1204 = vmatpush.msra.mxu0 0.0
    %1205 = vmatpush.msra.mxu0 0.0
    %1206 = vmatpush.msra.mxu0 0.0
    %1207 = vmatpush.msra.mxu0 0.0
    %1208 = vmatpush.msra.mxu0 0.0
    %1209 = vmatpush.msra.mxu0 0.0
    %1210 = vmatpush.msra.mxu0 0.0
    %1211 = vmatpush.msra.mxu0 0.0
    %1212 = vmatpush.msra.mxu0 0.0
    %v1213 = vand.u32 %v1063, 4294901760
    %v1214 = vsub.f32 %v1063, %v1213
    %v1215 = vand.u32 %v1214, 4294901760
    %1216 = vmatpush.msra.mxu0 %v1215
    %v1217 = vand.u32 %v1049, 4294901760
    %v1218 = vsub.f32 %v1049, %v1217
    %v1219 = vand.u32 %v1218, 4294901760
    %1220 = vmatpush.msra.mxu0 %v1219
    %v1221 = vand.u32 %v1045, 4294901760
    %v1222 = vsub.f32 %v1045, %v1221
    %v1223 = vand.u32 %v1222, 4294901760
    %1224 = vmatpush.msra.mxu0 %v1223
    %v1225 = vand.u32 %v1041, 4294901760
    %v1226 = vsub.f32 %v1041, %v1225
    %v1227 = vand.u32 %v1226, 4294901760
    %1228 = vmatpush.msra.mxu0 %v1227
    %v1229 = vand.u32 %v1059, 4294901760
    %1230 = vmatmul.f32.gmra.mxu0 %v1229
    %v1231 = vpop.f32.mrf.mxu0
    %v1232 = vadd.f32 %v1199, %v1231
    %1233 = vdwg.mxu0
    %1234 = vmatpush.msra.mxu0 0.0
    %1235 = vmatpush.msra.mxu0 0.0
    %1236 = vmatpush.msra.mxu0 0.0
    %1237 = vmatpush.msra.mxu0 0.0
    %1238 = vmatpush.msra.mxu0 0.0
    %1239 = vmatpush.msra.mxu0 0.0
    %1240 = vmatpush.msra.mxu0 0.0
    %1241 = vmatpush.msra.mxu0 0.0
    %1242 = vmatpush.msra.mxu0 0.0
    %1243 = vmatpush.msra.mxu0 0.0
    %1244 = vmatpush.msra.mxu0 0.0
    %1245 = vmatpush.msra.mxu0 0.0
    %v1246 = vand.u32 %v1063, 4294901760
    %1247 = vmatpush.msra.mxu0 %v1246
    %v1248 = vand.u32 %v1049, 4294901760
    %1249 = vmatpush.msra.mxu0 %v1248
    %v1250 = vand.u32 %v1045, 4294901760
    %1251 = vmatpush.msra.mxu0 %v1250
    %v1252 = vand.u32 %v1041, 4294901760
    %1253 = vmatpush.msra.mxu0 %v1252
    %v1254 = vand.u32 %v1059, 4294901760
    %1255 = vmatmul.f32.gmra.mxu0 %v1254
    %v1256 = vpop.f32.mrf.mxu0
    %v1257 = vadd.f32 %v1232, %v1256
    %1258 = vdwg.mxu0
    %1259 = vmatpush.msra.mxu0 0.0
    %1260 = vmatpush.msra.mxu0 0.0
    %1261 = vmatpush.msra.mxu0 0.0
    %1262 = vmatpush.msra.mxu0 0.0
    %1263 = vmatpush.msra.mxu0 0.0
    %1264 = vmatpush.msra.mxu0 0.0
    %1265 = vmatpush.msra.mxu0 0.0
    %1266 = vmatpush.msra.mxu0 0.0
    %1267 = vmatpush.msra.mxu0 0.0
    %1268 = vmatpush.msra.mxu0 0.0
    %1269 = vmatpush.msra.mxu0 0.0
    %1270 = vmatpush.msra.mxu0 0.0
    %v1271 = vand.u32 %v1066, 4294901760
    %1272 = vmatpush.msra.mxu0 %v1271
    %v1273 = vand.u32 %v1050, 4294901760
    %1274 = vmatpush.msra.mxu0 %v1273
    %v1275 = vand.u32 %v1046, 4294901760
    %1276 = vmatpush.msra.mxu0 %v1275
    %v1277 = vand.u32 %v1042, 4294901760
    %1278 = vmatpush.msra.mxu0 %v1277
    %v1279 = vand.u32 %v1059, 4294901760
    %v1280 = vsub.f32 %v1059, %v1279
    %v1281 = vand.u32 %v1280, 4294901760
    %v1282 = vsub.f32 %v1280, %v1281
    %v1283 = vand.u32 %v1282, 4294901760
    %1284 = vmatmul.f32.gmra.mxu0 %v1283
    %v1285 = vpop.f32.mrf.mxu0
    %v1286 = vadd.f32 %v54, %v1285
    %1287 = vdwg.mxu0
    %1288 = vmatpush.msra.mxu0 0.0
    %1289 = vmatpush.msra.mxu0 0.0
    %1290 = vmatpush.msra.mxu0 0.0
    %1291 = vmatpush.msra.mxu0 0.0
    %1292 = vmatpush.msra.mxu0 0.0
    %1293 = vmatpush.msra.mxu0 0.0
    %1294 = vmatpush.msra.mxu0 0.0
    %1295 = vmatpush.msra.mxu0 0.0
    %1296 = vmatpush.msra.mxu0 0.0
    %1297 = vmatpush.msra.mxu0 0.0
    %1298 = vmatpush.msra.mxu0 0.0
    %1299 = vmatpush.msra.mxu0 0.0
    %v1300 = vand.u32 %v1066, 4294901760
    %v1301 = vsub.f32 %v1066, %v1300
    %v1302 = vand.u32 %v1301, 4294901760
    %v1303 = vsub.f32 %v1301, %v1302
    %v1304 = vand.u32 %v1303, 4294901760
    %1305 = vmatpush.msra.mxu0 %v1304
    %v1306 = vand.u32 %v1050, 4294901760
    %v1307 = vsub.f32 %v1050, %v1306
    %v1308 = vand.u32 %v1307, 4294901760
    %v1309 = vsub.f32 %v1307, %v1308
    %v1310 = vand.u32 %v1309, 4294901760
    %1311 = vmatpush.msra.mxu0 %v1310
    %v1312 = vand.u32 %v1046, 4294901760
    %v1313 = vsub.f32 %v1046, %v1312
    %v1314 = vand.u32 %v1313, 4294901760
    %v1315 = vsub.f32 %v1313, %v1314
    %v1316 = vand.u32 %v1315, 4294901760
    %1317 = vmatpush.msra.mxu0 %v1316
    %v1318 = vand.u32 %v1042, 4294901760
    %v1319 = vsub.f32 %v1042, %v1318
    %v1320 = vand.u32 %v1319, 4294901760
    %v1321 = vsub.f32 %v1319, %v1320
    %v1322 = vand.u32 %v1321, 4294901760
    %1323 = vmatpush.msra.mxu0 %v1322
    %v1324 = vand.u32 %v1059, 4294901760
    %1325 = vmatmul.f32.gmra.mxu0 %v1324
    %v1326 = vpop.f32.mrf.mxu0
    %v1327 = vadd.f32 %v1286, %v1326
    %1328 = vdwg.mxu0
    %1329 = vmatpush.msra.mxu0 0.0
    %1330 = vmatpush.msra.mxu0 0.0
    %1331 = vmatpush.msra.mxu0 0.0
    %1332 = vmatpush.msra.mxu0 0.0
    %1333 = vmatpush.msra.mxu0 0.0
    %1334 = vmatpush.msra.mxu0 0.0
    %1335 = vmatpush.msra.mxu0 0.0
    %1336 = vmatpush.msra.mxu0 0.0
    %1337 = vmatpush.msra.mxu0 0.0
    %1338 = vmatpush.msra.mxu0 0.0
    %1339 = vmatpush.msra.mxu0 0.0
    %1340 = vmatpush.msra.mxu0 0.0
    %v1341 = vand.u32 %v1066, 4294901760
    %v1342 = vsub.f32 %v1066, %v1341
    %1343 = vmatpush.msra.mxu0 %v1342
    %v1344 = vand.u32 %v1050, 4294901760
    %v1345 = vsub.f32 %v1050, %v1344
    %1346 = vmatpush.msra.mxu0 %v1345
    %v1347 = vand.u32 %v1046, 4294901760
    %v1348 = vsub.f32 %v1046, %v1347
    %1349 = vmatpush.msra.mxu0 %v1348
    %v1350 = vand.u32 %v1042, 4294901760
    %v1351 = vsub.f32 %v1042, %v1350
    %1352 = vmatpush.msra.mxu0 %v1351
    %v1353 = vand.u32 %v1059, 4294901760
    %v1354 = vsub.f32 %v1059, %v1353
    %1355 = vmatmul.f32.gmra.mxu0 %v1354
    %v1356 = vpop.f32.mrf.mxu0
    %v1357 = vadd.f32 %v1327, %v1356
    %1358 = vdwg.mxu0
    %1359 = vmatpush.msra.mxu0 0.0
    %1360 = vmatpush.msra.mxu0 0.0
    %1361 = vmatpush.msra.mxu0 0.0
    %1362 = vmatpush.msra.mxu0 0.0
    %1363 = vmatpush.msra.mxu0 0.0
    %1364 = vmatpush.msra.mxu0 0.0
    %1365 = vmatpush.msra.mxu0 0.0
    %1366 = vmatpush.msra.mxu0 0.0
    %1367 = vmatpush.msra.mxu0 0.0
    %1368 = vmatpush.msra.mxu0 0.0
    %1369 = vmatpush.msra.mxu0 0.0
    %1370 = vmatpush.msra.mxu0 0.0
    %v1371 = vand.u32 %v1066, 4294901760
    %1372 = vmatpush.msra.mxu0 %v1371
    %v1373 = vand.u32 %v1050, 4294901760
    %1374 = vmatpush.msra.mxu0 %v1373
    %v1375 = vand.u32 %v1046, 4294901760
    %1376 = vmatpush.msra.mxu0 %v1375
    %v1377 = vand.u32 %v1042, 4294901760
    %1378 = vmatpush.msra.mxu0 %v1377
    %v1379 = vand.u32 %v1059, 4294901760
    %v1380 = vsub.f32 %v1059, %v1379
    %v1381 = vand.u32 %v1380, 4294901760
    %1382 = vmatmul.f32.gmra.mxu0 %v1381
    %v1383 = vpop.f32.mrf.mxu0
    %v1384 = vadd.f32 %v1357, %v1383
    %1385 = vdwg.mxu0
    %1386 = vmatpush.msra.mxu0 0.0
    %1387 = vmatpush.msra.mxu0 0.0
    %1388 = vmatpush.msra.mxu0 0.0
    %1389 = vmatpush.msra.mxu0 0.0
    %1390 = vmatpush.msra.mxu0 0.0
    %1391 = vmatpush.msra.mxu0 0.0
    %1392 = vmatpush.msra.mxu0 0.0
    %1393 = vmatpush.msra.mxu0 0.0
    %1394 = vmatpush.msra.mxu0 0.0
    %1395 = vmatpush.msra.mxu0 0.0
    %1396 = vmatpush.msra.mxu0 0.0
    %1397 = vmatpush.msra.mxu0 0.0
    %v1398 = vand.u32 %v1066, 4294901760
    %v1399 = vsub.f32 %v1066, %v1398
    %v1400 = vand.u32 %v1399, 4294901760
    %1401 = vmatpush.msra.mxu0 %v1400
    %v1402 = vand.u32 %v1050, 4294901760
    %v1403 = vsub.f32 %v1050, %v1402
    %v1404 = vand.u32 %v1403, 4294901760
    %1405 = vmatpush.msra.mxu0 %v1404
    %v1406 = vand.u32 %v1046, 4294901760
    %v1407 = vsub.f32 %v1046, %v1406
    %v1408 = vand.u32 %v1407, 4294901760
    %1409 = vmatpush.msra.mxu0 %v1408
    %v1410 = vand.u32 %v1042, 4294901760
    %v1411 = vsub.f32 %v1042, %v1410
    %v1412 = vand.u32 %v1411, 4294901760
    %1413 = vmatpush.msra.mxu0 %v1412
    %v1414 = vand.u32 %v1059, 4294901760
    %1415 = vmatmul.f32.gmra.mxu0 %v1414
    %v1416 = vpop.f32.mrf.mxu0
    %v1417 = vadd.f32 %v1384, %v1416
    %1418 = vdwg.mxu0
    %1419 = vmatpush.msra.mxu0 0.0
    %1420 = vmatpush.msra.mxu0 0.0
    %1421 = vmatpush.msra.mxu0 0.0
    %1422 = vmatpush.msra.mxu0 0.0
    %1423 = vmatpush.msra.mxu0 0.0
    %1424 = vmatpush.msra.mxu0 0.0
    %1425 = vmatpush.msra.mxu0 0.0
    %1426 = vmatpush.msra.mxu0 0.0
    %1427 = vmatpush.msra.mxu0 0.0
    %1428 = vmatpush.msra.mxu0 0.0
    %1429 = vmatpush.msra.mxu0 0.0
    %1430 = vmatpush.msra.mxu0 0.0
    %v1431 = vand.u32 %v1066, 4294901760
    %1432 = vmatpush.msra.mxu0 %v1431
    %v1433 = vand.u32 %v1050, 4294901760
    %1434 = vmatpush.msra.mxu0 %v1433
    %v1435 = vand.u32 %v1046, 4294901760
    %1436 = vmatpush.msra.mxu0 %v1435
    %v1437 = vand.u32 %v1042, 4294901760
    %1438 = vmatpush.msra.mxu0 %v1437
    %v1439 = vand.u32 %v1059, 4294901760
    %1440 = vmatmul.f32.gmra.mxu0 %v1439
    %v1441 = vpop.f32.mrf.mxu0
    %v1442 = vadd.f32 %v1417, %v1441
    %1443 = vdwg.mxu0
    %1444 = vmatpush.msra.mxu0 0.0
    %1445 = vmatpush.msra.mxu0 0.0
    %1446 = vmatpush.msra.mxu0 0.0
    %1447 = vmatpush.msra.mxu0 0.0
    %1448 = vmatpush.msra.mxu0 0.0
    %1449 = vmatpush.msra.mxu0 0.0
    %1450 = vmatpush.msra.mxu0 0.0
    %1451 = vmatpush.msra.mxu0 0.0
    %1452 = vmatpush.msra.mxu0 0.0
    %1453 = vmatpush.msra.mxu0 0.0
    %1454 = vmatpush.msra.mxu0 0.0
    %1455 = vmatpush.msra.mxu0 0.0
    %v1456 = vand.u32 %v1069, 4294901760
    %1457 = vmatpush.msra.mxu0 %v1456
    %v1458 = vand.u32 %v1051, 4294901760
    %1459 = vmatpush.msra.mxu0 %v1458
    %v1460 = vand.u32 %v1047, 4294901760
    %1461 = vmatpush.msra.mxu0 %v1460
    %v1462 = vand.u32 %v1043, 4294901760
    %1463 = vmatpush.msra.mxu0 %v1462
    %v1464 = vand.u32 %v1059, 4294901760
    %v1465 = vsub.f32 %v1059, %v1464
    %v1466 = vand.u32 %v1465, 4294901760
    %v1467 = vsub.f32 %v1465, %v1466
    %v1468 = vand.u32 %v1467, 4294901760
    %1469 = vmatmul.f32.gmra.mxu0 %v1468
    %v1470 = vpop.f32.mrf.mxu0
    %v1471 = vadd.f32 %v54, %v1470
    %1472 = vdwg.mxu0
    %1473 = vmatpush.msra.mxu0 0.0
    %1474 = vmatpush.msra.mxu0 0.0
    %1475 = vmatpush.msra.mxu0 0.0
    %1476 = vmatpush.msra.mxu0 0.0
    %1477 = vmatpush.msra.mxu0 0.0
    %1478 = vmatpush.msra.mxu0 0.0
    %1479 = vmatpush.msra.mxu0 0.0
    %1480 = vmatpush.msra.mxu0 0.0
    %1481 = vmatpush.msra.mxu0 0.0
    %1482 = vmatpush.msra.mxu0 0.0
    %1483 = vmatpush.msra.mxu0 0.0
    %1484 = vmatpush.msra.mxu0 0.0
    %v1485 = vand.u32 %v1069, 4294901760
    %v1486 = vsub.f32 %v1069, %v1485
    %v1487 = vand.u32 %v1486, 4294901760
    %v1488 = vsub.f32 %v1486, %v1487
    %v1489 = vand.u32 %v1488, 4294901760
    %1490 = vmatpush.msra.mxu0 %v1489
    %v1491 = vand.u32 %v1051, 4294901760
    %v1492 = vsub.f32 %v1051, %v1491
    %v1493 = vand.u32 %v1492, 4294901760
    %v1494 = vsub.f32 %v1492, %v1493
    %v1495 = vand.u32 %v1494, 4294901760
    %1496 = vmatpush.msra.mxu0 %v1495
    %v1497 = vand.u32 %v1047, 4294901760
    %v1498 = vsub.f32 %v1047, %v1497
    %v1499 = vand.u32 %v1498, 4294901760
    %v1500 = vsub.f32 %v1498, %v1499
    %v1501 = vand.u32 %v1500, 4294901760
    %1502 = vmatpush.msra.mxu0 %v1501
    %v1503 = vand.u32 %v1043, 4294901760
    %v1504 = vsub.f32 %v1043, %v1503
    %v1505 = vand.u32 %v1504, 4294901760
    %v1506 = vsub.f32 %v1504, %v1505
    %v1507 = vand.u32 %v1506, 4294901760
    %1508 = vmatpush.msra.mxu0 %v1507
    %v1509 = vand.u32 %v1059, 4294901760
    %1510 = vmatmul.f32.gmra.mxu0 %v1509
    %v1511 = vpop.f32.mrf.mxu0
    %v1512 = vadd.f32 %v1471, %v1511
    %1513 = vdwg.mxu0
    %1514 = vmatpush.msra.mxu0 0.0
    %1515 = vmatpush.msra.mxu0 0.0
    %1516 = vmatpush.msra.mxu0 0.0
    %1517 = vmatpush.msra.mxu0 0.0
    %1518 = vmatpush.msra.mxu0 0.0
    %1519 = vmatpush.msra.mxu0 0.0
    %1520 = vmatpush.msra.mxu0 0.0
    %1521 = vmatpush.msra.mxu0 0.0
    %1522 = vmatpush.msra.mxu0 0.0
    %1523 = vmatpush.msra.mxu0 0.0
    %1524 = vmatpush.msra.mxu0 0.0
    %1525 = vmatpush.msra.mxu0 0.0
    %v1526 = vand.u32 %v1069, 4294901760
    %v1527 = vsub.f32 %v1069, %v1526
    %1528 = vmatpush.msra.mxu0 %v1527
    %v1529 = vand.u32 %v1051, 4294901760
    %v1530 = vsub.f32 %v1051, %v1529
    %1531 = vmatpush.msra.mxu0 %v1530
    %v1532 = vand.u32 %v1047, 4294901760
    %v1533 = vsub.f32 %v1047, %v1532
    %1534 = vmatpush.msra.mxu0 %v1533
    %v1535 = vand.u32 %v1043, 4294901760
    %v1536 = vsub.f32 %v1043, %v1535
    %1537 = vmatpush.msra.mxu0 %v1536
    %v1538 = vand.u32 %v1059, 4294901760
    %v1539 = vsub.f32 %v1059, %v1538
    %1540 = vmatmul.f32.gmra.mxu0 %v1539
    %v1541 = vpop.f32.mrf.mxu0
    %v1542 = vadd.f32 %v1512, %v1541
    %1543 = vdwg.mxu0
    %1544 = vmatpush.msra.mxu0 0.0
    %1545 = vmatpush.msra.mxu0 0.0
    %1546 = vmatpush.msra.mxu0 0.0
    %1547 = vmatpush.msra.mxu0 0.0
    %1548 = vmatpush.msra.mxu0 0.0
    %1549 = vmatpush.msra.mxu0 0.0
    %1550 = vmatpush.msra.mxu0 0.0
    %1551 = vmatpush.msra.mxu0 0.0
    %1552 = vmatpush.msra.mxu0 0.0
    %1553 = vmatpush.msra.mxu0 0.0
    %1554 = vmatpush.msra.mxu0 0.0
    %1555 = vmatpush.msra.mxu0 0.0
    %v1556 = vand.u32 %v1069, 4294901760
    %1557 = vmatpush.msra.mxu0 %v1556
    %v1558 = vand.u32 %v1051, 4294901760
    %1559 = vmatpush.msra.mxu0 %v1558
    %v1560 = vand.u32 %v1047, 4294901760
    %1561 = vmatpush.msra.mxu0 %v1560
    %v1562 = vand.u32 %v1043, 4294901760
    %1563 = vmatpush.msra.mxu0 %v1562
    %v1564 = vand.u32 %v1059, 4294901760
    %v1565 = vsub.f32 %v1059, %v1564
    %v1566 = vand.u32 %v1565, 4294901760
    %1567 = vmatmul.f32.gmra.mxu0 %v1566
    %v1568 = vpop.f32.mrf.mxu0
    %v1569 = vadd.f32 %v1542, %v1568
    %1570 = vdwg.mxu0
    %1571 = vmatpush.msra.mxu0 0.0
    %1572 = vmatpush.msra.mxu0 0.0
    %1573 = vmatpush.msra.mxu0 0.0
    %1574 = vmatpush.msra.mxu0 0.0
    %1575 = vmatpush.msra.mxu0 0.0
    %1576 = vmatpush.msra.mxu0 0.0
    %1577 = vmatpush.msra.mxu0 0.0
    %1578 = vmatpush.msra.mxu0 0.0
    %1579 = vmatpush.msra.mxu0 0.0
    %1580 = vmatpush.msra.mxu0 0.0
    %1581 = vmatpush.msra.mxu0 0.0
    %1582 = vmatpush.msra.mxu0 0.0
    %v1583 = vand.u32 %v1069, 4294901760
    %v1584 = vsub.f32 %v1069, %v1583
    %v1585 = vand.u32 %v1584, 4294901760
    %1586 = vmatpush.msra.mxu0 %v1585
    %v1587 = vand.u32 %v1051, 4294901760
    %v1588 = vsub.f32 %v1051, %v1587
    %v1589 = vand.u32 %v1588, 4294901760
    %1590 = vmatpush.msra.mxu0 %v1589
    %v1591 = vand.u32 %v1047, 4294901760
    %v1592 = vsub.f32 %v1047, %v1591
    %v1593 = vand.u32 %v1592, 4294901760
    %1594 = vmatpush.msra.mxu0 %v1593
    %v1595 = vand.u32 %v1043, 4294901760
    %v1596 = vsub.f32 %v1043, %v1595
    %v1597 = vand.u32 %v1596, 4294901760
    %1598 = vmatpush.msra.mxu0 %v1597
    %v1599 = vand.u32 %v1059, 4294901760
    %1600 = vmatmul.f32.gmra.mxu0 %v1599
    %v1601 = vpop.f32.mrf.mxu0
    %v1602 = vadd.f32 %v1569, %v1601
    %1603 = vdwg.mxu0
    %1604 = vmatpush.msra.mxu0 0.0
    %1605 = vmatpush.msra.mxu0 0.0
    %1606 = vmatpush.msra.mxu0 0.0
    %1607 = vmatpush.msra.mxu0 0.0
    %1608 = vmatpush.msra.mxu0 0.0
    %1609 = vmatpush.msra.mxu0 0.0
    %1610 = vmatpush.msra.mxu0 0.0
    %1611 = vmatpush.msra.mxu0 0.0
    %1612 = vmatpush.msra.mxu0 0.0
    %1613 = vmatpush.msra.mxu0 0.0
    %1614 = vmatpush.msra.mxu0 0.0
    %1615 = vmatpush.msra.mxu0 0.0
    %v1616 = vand.u32 %v1069, 4294901760
    %1617 = vmatpush.msra.mxu0 %v1616
    %v1618 = vand.u32 %v1051, 4294901760
    %1619 = vmatpush.msra.mxu0 %v1618
    %v1620 = vand.u32 %v1047, 4294901760
    %1621 = vmatpush.msra.mxu0 %v1620
    %v1622 = vand.u32 %v1043, 4294901760
    %1623 = vmatpush.msra.mxu0 %v1622
    %v1624 = vand.u32 %v1059, 4294901760
    %1625 = vmatmul.f32.gmra.mxu0 %v1624
    %v1626 = vpop.f32.mrf.mxu0
    %v1627 = vadd.f32 %v1602, %v1626
    %1628 = vdwg.mxu0
    %1629 = vmatpush.msra.mxu0 0.0
    %1630 = vmatpush.msra.mxu0 0.0
    %1631 = vmatpush.msra.mxu0 0.0
    %1632 = vmatpush.msra.mxu0 0.0
    %1633 = vmatpush.msra.mxu0 0.0
    %1634 = vmatpush.msra.mxu0 0.0
    %1635 = vmatpush.msra.mxu0 0.0
    %1636 = vmatpush.msra.mxu0 0.0
    %1637 = vmatpush.msra.mxu0 0.0
    %1638 = vmatpush.msra.mxu0 0.0
    %1639 = vmatpush.msra.mxu0 0.0
    %1640 = vmatpush.msra.mxu0 0.0
    %v1641 = vand.u32 %v1072, 4294901760
    %1642 = vmatpush.msra.mxu0 %v1641
    %v1643 = vand.u32 %v1052, 4294901760
    %1644 = vmatpush.msra.mxu0 %v1643
    %v1645 = vand.u32 %v1048, 4294901760
    %1646 = vmatpush.msra.mxu0 %v1645
    %v1647 = vand.u32 %v1044, 4294901760
    %1648 = vmatpush.msra.mxu0 %v1647
    %v1649 = vand.u32 %v1059, 4294901760
    %v1650 = vsub.f32 %v1059, %v1649
    %v1651 = vand.u32 %v1650, 4294901760
    %v1652 = vsub.f32 %v1650, %v1651
    %v1653 = vand.u32 %v1652, 4294901760
    %1654 = vmatmul.f32.gmra.mxu0 %v1653
    %v1655 = vpop.f32.mrf.mxu0
    %v1656 = vadd.f32 %v54, %v1655
    %1657 = vdwg.mxu0
    %1658 = vmatpush.msra.mxu0 0.0
    %1659 = vmatpush.msra.mxu0 0.0
    %1660 = vmatpush.msra.mxu0 0.0
    %1661 = vmatpush.msra.mxu0 0.0
    %1662 = vmatpush.msra.mxu0 0.0
    %1663 = vmatpush.msra.mxu0 0.0
    %1664 = vmatpush.msra.mxu0 0.0
    %1665 = vmatpush.msra.mxu0 0.0
    %1666 = vmatpush.msra.mxu0 0.0
    %1667 = vmatpush.msra.mxu0 0.0
    %1668 = vmatpush.msra.mxu0 0.0
    %1669 = vmatpush.msra.mxu0 0.0
    %v1670 = vand.u32 %v1072, 4294901760
    %v1671 = vsub.f32 %v1072, %v1670
    %v1672 = vand.u32 %v1671, 4294901760
    %v1673 = vsub.f32 %v1671, %v1672
    %v1674 = vand.u32 %v1673, 4294901760
    %1675 = vmatpush.msra.mxu0 %v1674
    %v1676 = vand.u32 %v1052, 4294901760
    %v1677 = vsub.f32 %v1052, %v1676
    %v1678 = vand.u32 %v1677, 4294901760
    %v1679 = vsub.f32 %v1677, %v1678
    %v1680 = vand.u32 %v1679, 4294901760
    %1681 = vmatpush.msra.mxu0 %v1680
    %v1682 = vand.u32 %v1048, 4294901760
    %v1683 = vsub.f32 %v1048, %v1682
    %v1684 = vand.u32 %v1683, 4294901760
    %v1685 = vsub.f32 %v1683, %v1684
    %v1686 = vand.u32 %v1685, 4294901760
    %1687 = vmatpush.msra.mxu0 %v1686
    %v1688 = vand.u32 %v1044, 4294901760
    %v1689 = vsub.f32 %v1044, %v1688
    %v1690 = vand.u32 %v1689, 4294901760
    %v1691 = vsub.f32 %v1689, %v1690
    %v1692 = vand.u32 %v1691, 4294901760
    %1693 = vmatpush.msra.mxu0 %v1692
    %v1694 = vand.u32 %v1059, 4294901760
    %1695 = vmatmul.f32.gmra.mxu0 %v1694
    %v1696 = vpop.f32.mrf.mxu0
    %v1697 = vadd.f32 %v1656, %v1696
    %1698 = vdwg.mxu0
    %1699 = vmatpush.msra.mxu0 0.0
    %1700 = vmatpush.msra.mxu0 0.0
    %1701 = vmatpush.msra.mxu0 0.0
    %1702 = vmatpush.msra.mxu0 0.0
    %1703 = vmatpush.msra.mxu0 0.0
    %1704 = vmatpush.msra.mxu0 0.0
    %1705 = vmatpush.msra.mxu0 0.0
    %1706 = vmatpush.msra.mxu0 0.0
    %1707 = vmatpush.msra.mxu0 0.0
    %1708 = vmatpush.msra.mxu0 0.0
    %1709 = vmatpush.msra.mxu0 0.0
    %1710 = vmatpush.msra.mxu0 0.0
    %v1711 = vand.u32 %v1072, 4294901760
    %v1712 = vsub.f32 %v1072, %v1711
    %1713 = vmatpush.msra.mxu0 %v1712
    %v1714 = vand.u32 %v1052, 4294901760
    %v1715 = vsub.f32 %v1052, %v1714
    %1716 = vmatpush.msra.mxu0 %v1715
    %v1717 = vand.u32 %v1048, 4294901760
    %v1718 = vsub.f32 %v1048, %v1717
    %1719 = vmatpush.msra.mxu0 %v1718
    %v1720 = vand.u32 %v1044, 4294901760
    %v1721 = vsub.f32 %v1044, %v1720
    %1722 = vmatpush.msra.mxu0 %v1721
    %v1723 = vand.u32 %v1059, 4294901760
    %v1724 = vsub.f32 %v1059, %v1723
    %1725 = vmatmul.f32.gmra.mxu0 %v1724
    %v1726 = vpop.f32.mrf.mxu0
    %v1727 = vadd.f32 %v1697, %v1726
    %1728 = vdwg.mxu0
    %1729 = vmatpush.msra.mxu0 0.0
    %1730 = vmatpush.msra.mxu0 0.0
    %1731 = vmatpush.msra.mxu0 0.0
    %1732 = vmatpush.msra.mxu0 0.0
    %1733 = vmatpush.msra.mxu0 0.0
    %1734 = vmatpush.msra.mxu0 0.0
    %1735 = vmatpush.msra.mxu0 0.0
    %1736 = vmatpush.msra.mxu0 0.0
    %1737 = vmatpush.msra.mxu0 0.0
    %1738 = vmatpush.msra.mxu0 0.0
    %1739 = vmatpush.msra.mxu0 0.0
    %1740 = vmatpush.msra.mxu0 0.0
    %v1741 = vand.u32 %v1072, 4294901760
    %1742 = vmatpush.msra.mxu0 %v1741
    %v1743 = vand.u32 %v1052, 4294901760
    %1744 = vmatpush.msra.mxu0 %v1743
    %v1745 = vand.u32 %v1048, 4294901760
    %1746 = vmatpush.msra.mxu0 %v1745
    %v1747 = vand.u32 %v1044, 4294901760
    %1748 = vmatpush.msra.mxu0 %v1747
    %v1749 = vand.u32 %v1059, 4294901760
    %v1750 = vsub.f32 %v1059, %v1749
    %v1751 = vand.u32 %v1750, 4294901760
    %1752 = vmatmul.f32.gmra.mxu0 %v1751
    %v1753 = vpop.f32.mrf.mxu0
    %v1754 = vadd.f32 %v1727, %v1753
    %1755 = vdwg.mxu0
    %1756 = vmatpush.msra.mxu0 0.0
    %1757 = vmatpush.msra.mxu0 0.0
    %1758 = vmatpush.msra.mxu0 0.0
    %1759 = vmatpush.msra.mxu0 0.0
    %1760 = vmatpush.msra.mxu0 0.0
    %1761 = vmatpush.msra.mxu0 0.0
    %1762 = vmatpush.msra.mxu0 0.0
    %1763 = vmatpush.msra.mxu0 0.0
    %1764 = vmatpush.msra.mxu0 0.0
    %1765 = vmatpush.msra.mxu0 0.0
    %1766 = vmatpush.msra.mxu0 0.0
    %1767 = vmatpush.msra.mxu0 0.0
    %v1768 = vand.u32 %v1072, 4294901760
    %v1769 = vsub.f32 %v1072, %v1768
    %v1770 = vand.u32 %v1769, 4294901760
    %1771 = vmatpush.msra.mxu0 %v1770
    %v1772 = vand.u32 %v1052, 4294901760
    %v1773 = vsub.f32 %v1052, %v1772
    %v1774 = vand.u32 %v1773, 4294901760
    %1775 = vmatpush.msra.mxu0 %v1774
    %v1776 = vand.u32 %v1048, 4294901760
    %v1777 = vsub.f32 %v1048, %v1776
    %v1778 = vand.u32 %v1777, 4294901760
    %1779 = vmatpush.msra.mxu0 %v1778
    %v1780 = vand.u32 %v1044, 4294901760
    %v1781 = vsub.f32 %v1044, %v1780
    %v1782 = vand.u32 %v1781, 4294901760
    %1783 = vmatpush.msra.mxu0 %v1782
    %v1784 = vand.u32 %v1059, 4294901760
    %1785 = vmatmul.f32.gmra.mxu0 %v1784
    %v1786 = vpop.f32.mrf.mxu0
    %v1787 = vadd.f32 %v1754, %v1786
    %1788 = vdwg.mxu0
    %1789 = vmatpush.msra.mxu0 0.0
    %1790 = vmatpush.msra.mxu0 0.0
    %1791 = vmatpush.msra.mxu0 0.0
    %1792 = vmatpush.msra.mxu0 0.0
    %1793 = vmatpush.msra.mxu0 0.0
    %1794 = vmatpush.msra.mxu0 0.0
    %1795 = vmatpush.msra.mxu0 0.0
    %1796 = vmatpush.msra.mxu0 0.0
    %1797 = vmatpush.msra.mxu0 0.0
    %1798 = vmatpush.msra.mxu0 0.0
    %1799 = vmatpush.msra.mxu0 0.0
    %1800 = vmatpush.msra.mxu0 0.0
    %v1801 = vand.u32 %v1072, 4294901760
    %1802 = vmatpush.msra.mxu0 %v1801
    %v1803 = vand.u32 %v1052, 4294901760
    %1804 = vmatpush.msra.mxu0 %v1803
    %v1805 = vand.u32 %v1048, 4294901760
    %1806 = vmatpush.msra.mxu0 %v1805
    %v1807 = vand.u32 %v1044, 4294901760
    %1808 = vmatpush.msra.mxu0 %v1807
    %v1809 = vand.u32 %v1059, 4294901760
    %1810 = vmatmul.f32.gmra.mxu0 %v1809
    %v1811 = vpop.f32.mrf.mxu0
    %v1812 = vadd.f32 %v1787, %v1811
    %1813 = vdwg.mxu0
    %v1818 = vrot.slane %v1442, 6
    %v1819 = vrot.slane %v1627, 4
    %v1820 = vrot.slane %v1812, 2
    %v1821 = vsel %vm76, %v1257, %v1818
    %vm1822 = vcmask 1045508
    %v1823 = vsel %vm1822, %v1819, %v1820
    %vm1824 = vcmask 1043456
    %v1825 = vsel %vm1824, %v1821, %v1823
    %1827 = vst [vmem:[#allocation2] sm:$0xff] %v1825
    // Predicated region
    $region22: #{tpu_custom_call.1} parent=1 // pred_check
      _
    $region23: #{tpu_custom_call.1} parent=1 // pred_check_branch
      %1829 = sbr.rel (0) target = $region25
    $region24: #{tpu_custom_call.1} parent=1 // pred_region
      %1831 = vsyncadd [#allocation3], 0
      %s1833 = sshll.u32 [#allocation2], 4
      %s1834 = int_to_ptr.vmem [resolvable:$true] %s1833
      %s1835 = sshll.u32 %s5, 4
      %s1836 = int_to_ptr.hbm [resolvable:$true] %s1835
      %1838 = dma.vmem_to_hbm [thread:$0]  %s1834, 128, %s1836, [#allocation3]
    $region25: #{tpu_custom_call.1} parent=1 // pred_fallthru
      _
    // Predicated region
    $region26: #{tpu_custom_call.1} parent=1 // pred_check
      _
    $region27: #{tpu_custom_call.1} parent=1 // pred_check_branch
      %1840 = sbr.rel (0) target = $region29
    $region28: #{tpu_custom_call.1} parent=1 // pred_region
      %1842 = dma.done [#allocation3], 128
    $region29: #{tpu_custom_call.1} parent=1 // pred_fallthru
      _
    %1843 = vsyncpa [#allocation3], 1

</llo_original>
